<compile_context>
chip_gen: v7x
topology: tpu7x:2x2x1
jax: 0.10.0
libtpu: 0.0.40
codegen_flags: <defaults>
</compile_context>

<pallas_src>
import functools
import math

import jax
import jax.numpy as jnp
from jax.experimental import pallas as pl
from jax.experimental.pallas import tpu as pltpu


def _round_up(x, m):
    return (x + m - 1) // m * m


def _autoencoder_kernel(n_mid, relu_mask,
                        x_ref, w0_ref, b0_ref, wmid_ref, bmid_ref,
                        wlast_ref, blast_ref, out_ref):
    """Fused MLP for one batch tile.

    x_ref:     bf16 (tile_b, in_pad)
    w0_ref:    bf16 (in_pad, hid_pad)      b0_ref:    f32 (1, hid_pad)
    wmid_ref:  bf16 (n_mid, hid_pad, hid_pad)
    bmid_ref:  f32  (n_mid, 1, hid_pad)
    wlast_ref: bf16 (hid_pad, in_pad)      blast_ref: f32 (1, in_pad)
    out_ref:   f32  (tile_b, in_pad)
    relu_mask[i] == True -> ReLU after layer i (static, len == n_mid + 2).
    """
    # Layer 0: bf16 x bf16 -> f32 accumulate on the MXU.
    h = jnp.dot(x_ref[...], w0_ref[...],
                preferred_element_type=jnp.float32) + b0_ref[...]
    if relu_mask[0]:
        h = jnp.maximum(h, 0.0)

    # Middle layers, statically unrolled with static indices into the stacks.
    for i in range(n_mid):
        w = wmid_ref[i]                       # bf16 (hid_pad, hid_pad)
        b = bmid_ref[i]                       # f32  (1, hid_pad)
        h = jnp.dot(h.astype(w.dtype), w,
                    preferred_element_type=jnp.float32) + b
        if relu_mask[1 + i]:
            h = jnp.maximum(h, 0.0)

    # Final layer (reconstruction), no ReLU per the module.
    w = wlast_ref[...]
    h = jnp.dot(h.astype(w.dtype), w,
                preferred_element_type=jnp.float32) + blast_ref[...]
    if relu_mask[-1]:
        h = jnp.maximum(h, 0.0)

    out_ref[...] = h.astype(out_ref.dtype)


def init_autoencoder_params(key, input_dim, latent_dim=5, hidden_dims=None):
    """Init mirroring nn.Linear defaults (uniform +-1/sqrt(fan_in)), padded and
    packed for the kernel.

    Returns (params, relu_mask, pads):
      params = (w0, b0, wmid, bmid, wlast, blast)
        w0    bf16 (in_pad, hid_pad),        b0    f32 (1, hid_pad)
        wmid  bf16 (n_mid, hid_pad, hid_pad) bmid  f32 (n_mid, 1, hid_pad)
        wlast bf16 (hid_pad, in_pad),        blast f32 (1, in_pad)
      pads = (in_pad, hid_pad)
    Layer order: encoder (input -> hidden... -> latent), decoder (latent -> ... -> input).
    Weights are stored pre-transposed (in, out) so the kernel computes h @ W + b
    (== PyTorch x @ W.T + b).
    """
    if hidden_dims is None:
        hidden_dims = [128, 64, 32]
    assert len(hidden_dims) >= 1, "kernel expects at least one hidden layer"

    enc_dims = [input_dim] + list(hidden_dims) + [latent_dim]
    dec_dims = [latent_dim] + list(hidden_dims)[::-1] + [input_dim]
    dims = enc_dims + dec_dims[1:]
    n_layers = len(dims) - 1
    n_enc = len(enc_dims) - 1

    # ReLU after every layer except the final encoder layer and final decoder layer.
    relu_mask = tuple(
        (i != n_enc - 1) and (i != n_layers - 1) for i in range(n_layers)
    )

    in_pad = _round_up(max(input_dim, 1), 128)
    hid_pad = _round_up(max(list(hidden_dims) + [latent_dim]), 128)

    def layer_pads(i):
        ip = in_pad if i == 0 else hid_pad
        op = in_pad if i == n_layers - 1 else hid_pad
        return ip, op

    ws, bs = [], []
    for li in range(n_layers):
        fan_in, fan_out = dims[li], dims[li + 1]
        ip, op = layer_pads(li)
        key, kw, kb = jax.random.split(key, 3)
        bound = 1.0 / math.sqrt(fan_in)
        w = jax.random.uniform(kw, (fan_in, fan_out), jnp.float32, -bound, bound)
        b = jax.random.uniform(kb, (1, fan_out), jnp.float32, -bound, bound)
        w_pad = jnp.zeros((ip, op), jnp.float32).at[:fan_in, :fan_out].set(w)
        b_pad = jnp.zeros((1, op), jnp.float32).at[:, :fan_out].set(b)
        ws.append(w_pad)
        bs.append(b_pad)

    w0 = ws[0].astype(jnp.bfloat16)
    b0 = bs[0]
    wmid = jnp.stack(ws[1:n_layers - 1], axis=0).astype(jnp.bfloat16)
    bmid = jnp.stack(bs[1:n_layers - 1], axis=0)
    wlast = ws[-1].astype(jnp.bfloat16)
    blast = bs[-1]

    params = (w0, b0, wmid, bmid, wlast, blast)
    return params, relu_mask, (in_pad, hid_pad)


def gene_expression_autoencoder_forward(x, params, relu_mask, pads, tile_b=512):
    """Run the fused Pallas autoencoder kernel. x: (batch, input_dim) float32."""
    w0, b0, wmid, bmid, wlast, blast = params
    in_pad, hid_pad = pads
    batch, input_dim = x.shape
    n_mid = int(wmid.shape[0])

    # Batch tiling: single grid step for small batches (no per-step overhead),
    # otherwise tile_b rows per step (default 512 = v6e/v7x-friendly multiple of 256).
    if batch <= tile_b:
        tile = _round_up(max(batch, 8), 8)
        batch_pad = tile
    else:
        tile = tile_b
        batch_pad = _round_up(batch, tile)
    grid = (batch_pad // tile,)

    # Zero-pad + bf16 cast fused into one producer; padded lanes/rows are 0.
    x_pad = (jnp.zeros((batch_pad, in_pad), jnp.bfloat16)
             .at[:batch, :input_dim].set(x.astype(jnp.bfloat16)))

    kernel = functools.partial(_autoencoder_kernel, n_mid, relu_mask)

    in_specs = [
        pl.BlockSpec((tile, in_pad), lambda i: (i, 0)),        # x: pipelined per tile
        pl.BlockSpec(w0.shape, lambda i: (0, 0)),              # params: VMEM-resident
        pl.BlockSpec(b0.shape, lambda i: (0, 0)),
        pl.BlockSpec(wmid.shape, lambda i: (0, 0, 0)),
        pl.BlockSpec(bmid.shape, lambda i: (0, 0, 0)),
        pl.BlockSpec(wlast.shape, lambda i: (0, 0)),
        pl.BlockSpec(blast.shape, lambda i: (0, 0)),
    ]
    out_specs = pl.BlockSpec((tile, in_pad), lambda i: (i, 0))

    # VMEM budget from actual footprint (double-buffered IO tiles + resident
    # params + a few f32 intermediates), clamped for v7x's 64 MiB physical VMEM.
    param_bytes = sum(int(p.size) * p.dtype.itemsize for p in params)
    io_bytes = 2 * tile * in_pad * 2 + 2 * tile * in_pad * 4   # x (bf16) + out (f32), 2 bufs
    hidden_bytes = 4 * tile * max(in_pad, hid_pad) * 4         # in-kernel intermediates
    vmem_limit = int(min(48 << 20,
                         max(16 << 20,
                             2 * param_bytes + io_bytes + hidden_bytes + (4 << 20))))

    flops = 2 * batch_pad * (in_pad * hid_pad
                             + n_mid * hid_pad * hid_pad
                             + hid_pad * in_pad)
    bytes_accessed = batch_pad * in_pad * 2 + batch_pad * in_pad * 4 + param_bytes

    out = pl.pallas_call(
        kernel,
        out_shape=jax.ShapeDtypeStruct((batch_pad, in_pad), jnp.float32),
        grid=grid,
        in_specs=in_specs,
        out_specs=out_specs,
        compiler_params=pltpu.CompilerParams(
            dimension_semantics=("parallel",),
            vmem_limit_bytes=vmem_limit,
        ),
        cost_estimate=pl.CostEstimate(
            flops=flops, transcendentals=0, bytes_accessed=bytes_accessed
        ),
    )(x_pad, w0, b0, wmid, bmid, wlast, blast)

    return out[:batch, :input_dim]


def reference_forward(x, params, relu_mask, pads):
    """Pure-JAX reference using the identical mixed-precision recipe."""
    w0, b0, wmid, bmid, wlast, blast = params
    in_pad, _ = pads
    batch, input_dim = x.shape

    h_in = (jnp.zeros((batch, in_pad), jnp.bfloat16)
            .at[:, :input_dim].set(x.astype(jnp.bfloat16)))
    h = jnp.dot(h_in, w0, preferred_element_type=jnp.float32) + b0
    if relu_mask[0]:
        h = jnp.maximum(h, 0.0)

    n_mid = int(wmid.shape[0])
    for i in range(n_mid):
        h = jnp.dot(h.astype(jnp.bfloat16), wmid[i],
                    preferred_element_type=jnp.float32) + bmid[i]
        if relu_mask[1 + i]:
            h = jnp.maximum(h, 0.0)

    h = jnp.dot(h.astype(jnp.bfloat16), wlast,
                preferred_element_type=jnp.float32) + blast
    if relu_mask[-1]:
        h = jnp.maximum(h, 0.0)
    return h[:, :input_dim]


if __name__ == "__main__":
    key = jax.random.PRNGKey(0)
    key_x, key_p = jax.random.split(key)

    batch = 200        # non-multiple of 8*k tiles -> exercises batch padding
    input_dim = 64     # number of genes (small synthetic size; padded to 128 lanes)
    latent_dim = 5
    hidden_dims = [128, 64, 32]

    x = jax.random.normal(key_x, (batch, input_dim), jnp.float32)
    params, relu_mask, pads = init_autoencoder_params(
        key_p, input_dim, latent_dim=latent_dim, hidden_dims=hidden_dims
    )

    out = gene_expression_autoencoder_forward(x, params, relu_mask, pads, tile_b=512)
    out = jax.block_until_ready(out)

    ref = reference_forward(x, params, relu_mask, pads)
    assert out.shape == (batch, input_dim), out.shape
    max_err = float(jnp.max(jnp.abs(out - ref)))
    assert jnp.allclose(out, ref, atol=2e-3, rtol=2e-3), max_err

    print("KERNEL_OK")
</pallas_src>

<mosaic_0001>
module attributes {stable_mosaic.version = 11 : i64} {
  func.func @_autoencoder_kernel(%arg0: i32, %arg1: memref<200x128xbf16, #tpu.memory_space<vmem>>, %arg2: memref<128x128xbf16, #tpu.memory_space<vmem>>, %arg3: memref<1x128xf32, #tpu.memory_space<vmem>>, %arg4: memref<6x128x128xbf16, #tpu.memory_space<vmem>>, %arg5: memref<6x1x128xf32, #tpu.memory_space<vmem>>, %arg6: memref<128x128xbf16, #tpu.memory_space<vmem>>, %arg7: memref<1x128xf32, #tpu.memory_space<vmem>>, %arg8: memref<200x128xf32, #tpu.memory_space<vmem>>) attributes {dimension_semantics = [#tpu.dimension_semantics<parallel>], iteration_bounds = array<i64: 1>, scalar_prefetch = 0 : i64, scratch_operands = 0 : i64, tpu.core_type = #tpu.core_type<tc>, window_params = [{transform_indices = @transform_0, window_bounds = array<i64: 200, 128>}, {pipeline_mode = #tpu.pipeline_mode<synchronous>, transform_indices = @transform_1, window_bounds = array<i64: 128, 128>}, {pipeline_mode = #tpu.pipeline_mode<synchronous>, transform_indices = @transform_2, window_bounds = array<i64: 1, 128>}, {pipeline_mode = #tpu.pipeline_mode<synchronous>, transform_indices = @transform_3, window_bounds = array<i64: 6, 128, 128>}, {pipeline_mode = #tpu.pipeline_mode<synchronous>, transform_indices = @transform_4, window_bounds = array<i64: 6, 1, 128>}, {pipeline_mode = #tpu.pipeline_mode<synchronous>, transform_indices = @transform_5, window_bounds = array<i64: 128, 128>}, {pipeline_mode = #tpu.pipeline_mode<synchronous>, transform_indices = @transform_6, window_bounds = array<i64: 1, 128>}, {transform_indices = @transform_7, window_bounds = array<i64: 200, 128>}]} {
    %c0 = arith.constant 0 : index
    %c0_0 = arith.constant 0 : index
    %0 = vector.load %arg1[%c0, %c0_0] : memref<200x128xbf16, #tpu.memory_space<vmem>>, vector<200x128xbf16>
    %c0_1 = arith.constant 0 : index
    %c0_2 = arith.constant 0 : index
    %1 = vector.load %arg2[%c0_1, %c0_2] : memref<128x128xbf16, #tpu.memory_space<vmem>>, vector<128x128xbf16>
    %cst = arith.constant dense<0.000000e+00> : vector<200x128xf32>
    %2 = tpu.matmul %0, %1, %cst {dimension_numbers = #tpu.dot_dimension_numbers<[1], [0], [0], [1], [0, 0, 1, 1], [], []>} : vector<200x128xbf16>, vector<128x128xbf16>, vector<200x128xf32> -> vector<200x128xf32>
    %c0_3 = arith.constant 0 : index
    %c0_4 = arith.constant 0 : index
    %3 = vector.load %arg3[%c0_3, %c0_4] : memref<1x128xf32, #tpu.memory_space<vmem>>, vector<1x128xf32>
    %4 = vector.broadcast %3 : vector<1x128xf32> to vector<200x128xf32>
    %5 = arith.addf %2, %4 : vector<200x128xf32>
    %cst_5 = arith.constant 0.000000e+00 : f32
    %6 = vector.broadcast %cst_5 : f32 to vector<200x128xf32>
    %7 = arith.maximumf %5, %6 : vector<200x128xf32>
    %c0_6 = arith.constant 0 : index
    %c0_7 = arith.constant 0 : index
    %c0_8 = arith.constant 0 : index
    %8 = vector.load %arg4[%c0_6, %c0_7, %c0_8] : memref<6x128x128xbf16, #tpu.memory_space<vmem>>, vector<1x128x128xbf16>
    %9 = vector.shape_cast %8 : vector<1x128x128xbf16> to vector<128x128xbf16>
    %c0_9 = arith.constant 0 : index
    %c0_10 = arith.constant 0 : index
    %c0_11 = arith.constant 0 : index
    %10 = vector.load %arg5[%c0_9, %c0_10, %c0_11] : memref<6x1x128xf32, #tpu.memory_space<vmem>>, vector<1x1x128xf32>
    %11 = vector.shape_cast %10 : vector<1x1x128xf32> to vector<1x128xf32>
    %12 = arith.truncf %7 : vector<200x128xf32> to vector<200x128xbf16>
    %cst_12 = arith.constant dense<0.000000e+00> : vector<200x128xf32>
    %13 = tpu.matmul %12, %9, %cst_12 {dimension_numbers = #tpu.dot_dimension_numbers<[1], [0], [0], [1], [0, 0, 1, 1], [], []>} : vector<200x128xbf16>, vector<128x128xbf16>, vector<200x128xf32> -> vector<200x128xf32>
    %14 = vector.broadcast %11 : vector<1x128xf32> to vector<200x128xf32>
    %15 = arith.addf %13, %14 : vector<200x128xf32>
    %cst_13 = arith.constant 0.000000e+00 : f32
    %16 = vector.broadcast %cst_13 : f32 to vector<200x128xf32>
    %17 = arith.maximumf %15, %16 : vector<200x128xf32>
    %c1 = arith.constant 1 : index
    %c0_14 = arith.constant 0 : index
    %c0_15 = arith.constant 0 : index
    %18 = vector.load %arg4[%c1, %c0_14, %c0_15] : memref<6x128x128xbf16, #tpu.memory_space<vmem>>, vector<1x128x128xbf16>
    %19 = vector.shape_cast %18 : vector<1x128x128xbf16> to vector<128x128xbf16>
    %c1_16 = arith.constant 1 : index
    %c0_17 = arith.constant 0 : index
    %c0_18 = arith.constant 0 : index
    %20 = vector.load %arg5[%c1_16, %c0_17, %c0_18] : memref<6x1x128xf32, #tpu.memory_space<vmem>>, vector<1x1x128xf32>
    %21 = vector.shape_cast %20 : vector<1x1x128xf32> to vector<1x128xf32>
    %22 = arith.truncf %17 : vector<200x128xf32> to vector<200x128xbf16>
    %cst_19 = arith.constant dense<0.000000e+00> : vector<200x128xf32>
    %23 = tpu.matmul %22, %19, %cst_19 {dimension_numbers = #tpu.dot_dimension_numbers<[1], [0], [0], [1], [0, 0, 1, 1], [], []>} : vector<200x128xbf16>, vector<128x128xbf16>, vector<200x128xf32> -> vector<200x128xf32>
    %24 = vector.broadcast %21 : vector<1x128xf32> to vector<200x128xf32>
    %25 = arith.addf %23, %24 : vector<200x128xf32>
    %cst_20 = arith.constant 0.000000e+00 : f32
    %26 = vector.broadcast %cst_20 : f32 to vector<200x128xf32>
    %27 = arith.maximumf %25, %26 : vector<200x128xf32>
    %c2 = arith.constant 2 : index
    %c0_21 = arith.constant 0 : index
    %c0_22 = arith.constant 0 : index
    %28 = vector.load %arg4[%c2, %c0_21, %c0_22] : memref<6x128x128xbf16, #tpu.memory_space<vmem>>, vector<1x128x128xbf16>
    %29 = vector.shape_cast %28 : vector<1x128x128xbf16> to vector<128x128xbf16>
    %c2_23 = arith.constant 2 : index
    %c0_24 = arith.constant 0 : index
    %c0_25 = arith.constant 0 : index
    %30 = vector.load %arg5[%c2_23, %c0_24, %c0_25] : memref<6x1x128xf32, #tpu.memory_space<vmem>>, vector<1x1x128xf32>
    %31 = vector.shape_cast %30 : vector<1x1x128xf32> to vector<1x128xf32>
    %32 = arith.truncf %27 : vector<200x128xf32> to vector<200x128xbf16>
    %cst_26 = arith.constant dense<0.000000e+00> : vector<200x128xf32>
    %33 = tpu.matmul %32, %29, %cst_26 {dimension_numbers = #tpu.dot_dimension_numbers<[1], [0], [0], [1], [0, 0, 1, 1], [], []>} : vector<200x128xbf16>, vector<128x128xbf16>, vector<200x128xf32> -> vector<200x128xf32>
    %34 = vector.broadcast %31 : vector<1x128xf32> to vector<200x128xf32>
    %35 = arith.addf %33, %34 : vector<200x128xf32>
    %c3 = arith.constant 3 : index
    %c0_27 = arith.constant 0 : index
    %c0_28 = arith.constant 0 : index
    %36 = vector.load %arg4[%c3, %c0_27, %c0_28] : memref<6x128x128xbf16, #tpu.memory_space<vmem>>, vector<1x128x128xbf16>
    %37 = vector.shape_cast %36 : vector<1x128x128xbf16> to vector<128x128xbf16>
    %c3_29 = arith.constant 3 : index
    %c0_30 = arith.constant 0 : index
    %c0_31 = arith.constant 0 : index
    %38 = vector.load %arg5[%c3_29, %c0_30, %c0_31] : memref<6x1x128xf32, #tpu.memory_space<vmem>>, vector<1x1x128xf32>
    %39 = vector.shape_cast %38 : vector<1x1x128xf32> to vector<1x128xf32>
    %40 = arith.truncf %35 : vector<200x128xf32> to vector<200x128xbf16>
    %cst_32 = arith.constant dense<0.000000e+00> : vector<200x128xf32>
    %41 = tpu.matmul %40, %37, %cst_32 {dimension_numbers = #tpu.dot_dimension_numbers<[1], [0], [0], [1], [0, 0, 1, 1], [], []>} : vector<200x128xbf16>, vector<128x128xbf16>, vector<200x128xf32> -> vector<200x128xf32>
    %42 = vector.broadcast %39 : vector<1x128xf32> to vector<200x128xf32>
    %43 = arith.addf %41, %42 : vector<200x128xf32>
    %cst_33 = arith.constant 0.000000e+00 : f32
    %44 = vector.broadcast %cst_33 : f32 to vector<200x128xf32>
    %45 = arith.maximumf %43, %44 : vector<200x128xf32>
    %c4 = arith.constant 4 : index
    %c0_34 = arith.constant 0 : index
    %c0_35 = arith.constant 0 : index
    %46 = vector.load %arg4[%c4, %c0_34, %c0_35] : memref<6x128x128xbf16, #tpu.memory_space<vmem>>, vector<1x128x128xbf16>
    %47 = vector.shape_cast %46 : vector<1x128x128xbf16> to vector<128x128xbf16>
    %c4_36 = arith.constant 4 : index
    %c0_37 = arith.constant 0 : index
    %c0_38 = arith.constant 0 : index
    %48 = vector.load %arg5[%c4_36, %c0_37, %c0_38] : memref<6x1x128xf32, #tpu.memory_space<vmem>>, vector<1x1x128xf32>
    %49 = vector.shape_cast %48 : vector<1x1x128xf32> to vector<1x128xf32>
    %50 = arith.truncf %45 : vector<200x128xf32> to vector<200x128xbf16>
    %cst_39 = arith.constant dense<0.000000e+00> : vector<200x128xf32>
    %51 = tpu.matmul %50, %47, %cst_39 {dimension_numbers = #tpu.dot_dimension_numbers<[1], [0], [0], [1], [0, 0, 1, 1], [], []>} : vector<200x128xbf16>, vector<128x128xbf16>, vector<200x128xf32> -> vector<200x128xf32>
    %52 = vector.broadcast %49 : vector<1x128xf32> to vector<200x128xf32>
    %53 = arith.addf %51, %52 : vector<200x128xf32>
    %cst_40 = arith.constant 0.000000e+00 : f32
    %54 = vector.broadcast %cst_40 : f32 to vector<200x128xf32>
    %55 = arith.maximumf %53, %54 : vector<200x128xf32>
    %c5 = arith.constant 5 : index
    %c0_41 = arith.constant 0 : index
    %c0_42 = arith.constant 0 : index
    %56 = vector.load %arg4[%c5, %c0_41, %c0_42] : memref<6x128x128xbf16, #tpu.memory_space<vmem>>, vector<1x128x128xbf16>
    %57 = vector.shape_cast %56 : vector<1x128x128xbf16> to vector<128x128xbf16>
    %c5_43 = arith.constant 5 : index
    %c0_44 = arith.constant 0 : index
    %c0_45 = arith.constant 0 : index
    %58 = vector.load %arg5[%c5_43, %c0_44, %c0_45] : memref<6x1x128xf32, #tpu.memory_space<vmem>>, vector<1x1x128xf32>
    %59 = vector.shape_cast %58 : vector<1x1x128xf32> to vector<1x128xf32>
    %60 = arith.truncf %55 : vector<200x128xf32> to vector<200x128xbf16>
    %cst_46 = arith.constant dense<0.000000e+00> : vector<200x128xf32>
    %61 = tpu.matmul %60, %57, %cst_46 {dimension_numbers = #tpu.dot_dimension_numbers<[1], [0], [0], [1], [0, 0, 1, 1], [], []>} : vector<200x128xbf16>, vector<128x128xbf16>, vector<200x128xf32> -> vector<200x128xf32>
    %62 = vector.broadcast %59 : vector<1x128xf32> to vector<200x128xf32>
    %63 = arith.addf %61, %62 : vector<200x128xf32>
    %cst_47 = arith.constant 0.000000e+00 : f32
    %64 = vector.broadcast %cst_47 : f32 to vector<200x128xf32>
    %65 = arith.maximumf %63, %64 : vector<200x128xf32>
    %c0_48 = arith.constant 0 : index
    %c0_49 = arith.constant 0 : index
    %66 = vector.load %arg6[%c0_48, %c0_49] : memref<128x128xbf16, #tpu.memory_space<vmem>>, vector<128x128xbf16>
    %67 = arith.truncf %65 : vector<200x128xf32> to vector<200x128xbf16>
    %cst_50 = arith.constant dense<0.000000e+00> : vector<200x128xf32>
    %68 = tpu.matmul %67, %66, %cst_50 {dimension_numbers = #tpu.dot_dimension_numbers<[1], [0], [0], [1], [0, 0, 1, 1], [], []>} : vector<200x128xbf16>, vector<128x128xbf16>, vector<200x128xf32> -> vector<200x128xf32>
    %c0_51 = arith.constant 0 : index
    %c0_52 = arith.constant 0 : index
    %69 = vector.load %arg7[%c0_51, %c0_52] : memref<1x128xf32, #tpu.memory_space<vmem>>, vector<1x128xf32>
    %70 = vector.broadcast %69 : vector<1x128xf32> to vector<200x128xf32>
    %71 = arith.addf %68, %70 : vector<200x128xf32>
    %c0_53 = arith.constant 0 : index
    %c0_54 = arith.constant 0 : index
    %72 = vector.load %arg8[%c0_53, %c0_54] : memref<200x128xf32, #tpu.memory_space<vmem>>, vector<200x128xf32>
    tpu.vector_store %arg8[%c0_53, %c0_54], %71 {strides = array<i32>} : memref<200x128xf32, #tpu.memory_space<vmem>>, vector<200x128xf32>,
    return
  }
  func.func @transform_0(%arg0: i32) -> (i32, i32) {
    %c0_i32 = arith.constant 0 : i32
    %c0_i32_0 = arith.constant 0 : i32
    return %arg0, %c0_i32 : i32, i32
  }
  func.func @transform_1(%arg0: i32) -> (i32, i32) {
    %c0_i32 = arith.constant 0 : i32
    %c0_i32_0 = arith.constant 0 : i32
    %c0_i32_1 = arith.constant 0 : i32
    return %c0_i32, %c0_i32_0 : i32, i32
  }
  func.func @transform_2(%arg0: i32) -> (i32, i32) {
    %c0_i32 = arith.constant 0 : i32
    %c0_i32_0 = arith.constant 0 : i32
    %c0_i32_1 = arith.constant 0 : i32
    return %c0_i32, %c0_i32_0 : i32, i32
  }
  func.func @transform_3(%arg0: i32) -> (i32, i32, i32) {
    %c0_i32 = arith.constant 0 : i32
    %c0_i32_0 = arith.constant 0 : i32
    %c0_i32_1 = arith.constant 0 : i32
    %c0_i32_2 = arith.constant 0 : i32
    return %c0_i32, %c0_i32_0, %c0_i32_1 : i32, i32, i32
  }
  func.func @transform_4(%arg0: i32) -> (i32, i32, i32) {
    %c0_i32 = arith.constant 0 : i32
    %c0_i32_0 = arith.constant 0 : i32
    %c0_i32_1 = arith.constant 0 : i32
    %c0_i32_2 = arith.constant 0 : i32
    return %c0_i32, %c0_i32_0, %c0_i32_1 : i32, i32, i32
  }
  func.func @transform_5(%arg0: i32) -> (i32, i32) {
    %c0_i32 = arith.constant 0 : i32
    %c0_i32_0 = arith.constant 0 : i32
    %c0_i32_1 = arith.constant 0 : i32
    return %c0_i32, %c0_i32_0 : i32, i32
  }
  func.func @transform_6(%arg0: i32) -> (i32, i32) {
    %c0_i32 = arith.constant 0 : i32
    %c0_i32_0 = arith.constant 0 : i32
    %c0_i32_1 = arith.constant 0 : i32
    return %c0_i32, %c0_i32_0 : i32, i32
  }
  func.func @transform_7(%arg0: i32) -> (i32, i32) {
    %c0_i32 = arith.constant 0 : i32
    %c0_i32_0 = arith.constant 0 : i32
    return %arg0, %c0_i32 : i32, i32
  }
}

</mosaic_0001>

<llo_original>
// kernel: tpu_custom_call.1
$region0: #{tpu_custom_call.1}
  #allocation0 [shape = 'u32[]', space=smem, size = 0x4, offset = 0x4, fixed_abs, tag = 'smem constant byte address 0x4 - core index']
  #allocation1 [shape = 'u32[144,128]{1,0:T(1,128)}', space=vmem, size = 0x12000, scoped, tag = 'internal scratch']
  %s0 = inlined_call_operand.hbm [shape: bf16[200,128], index: 0, kind: input, shape index: {}]
  %s1 = inlined_call_operand.hbm [shape: bf16[128,128], index: 1, kind: input, shape index: {}]
  %s2 = inlined_call_operand.vmem [shape: f32[1,128], index: 2, kind: input, shape index: {}]
  %s3 = inlined_call_operand.hbm [shape: bf16[6,128,128], index: 3, kind: input, shape index: {}]
  %s4 = inlined_call_operand.vmem [shape: f32[6,1,128], index: 4, kind: input, shape index: {}]
  %s5 = inlined_call_operand.hbm [shape: bf16[128,128], index: 5, kind: input, shape index: {}]
  %s6 = inlined_call_operand.vmem [shape: f32[1,128], index: 6, kind: input, shape index: {}]
  %s7 = inlined_call_operand.hbm [shape: f32[200,128], index: 7, kind: output, shape index: {}]
  %s8 = sld [smem:[#allocation0]]
  $region54: #{tpu_custom_call.1} parent=0
    _
  %s10 = ssub.s32 1, %s8
  %s11 = scalar_select 0, %s10, %s8
  $region1: #{tpu_custom_call.1} parent=0
    #allocation2 [shape = 'u8[51200]{0}', space=vmem, size = 0xc800, scoped, tag = 'input window, operand 0, single buffered']
    #allocation3 [shape = 's32[1]{0}', space=sflag, size = 0x4, scoped, tag = 'scoped memory for tpu_custom_call.1']
    #allocation4 [shape = 's32[1]{0}', space=sflag, size = 0x4, scoped, tag = 'scoped memory for tpu_custom_call.1']
    #allocation5 [shape = 'u8[32768]{0}', space=vmem, size = 0x8000, scoped, tag = 'input window, operand 1, single buffered']
    #allocation6 [shape = 's32[1]{0}', space=sflag, size = 0x4, scoped, tag = 'scoped memory for tpu_custom_call.1']
    #allocation7 [shape = 'u8[196608]{0}', space=vmem, size = 0x30000, scoped, tag = 'input window, operand 3, single buffered']
    #allocation8 [shape = 'u8[32768]{0}', space=vmem, size = 0x8000, scoped, tag = 'input window, operand 5, single buffered']
    #allocation9 [shape = 's32[1]{0}', space=sflag, size = 0x4, scoped, tag = 'scoped memory for tpu_custom_call.1']
    #allocation10 [shape = 'u8[102400]{0}', space=vmem, size = 0x19000, scoped, tag = 'output window, operand 0, single buffered']
    %12 = vsyncpa [#allocation3], 0
    %13 = vsyncpa [#allocation6], 0
    %14 = vsyncpa [#allocation9], 0
    %15 = vsyncpa [#allocation4], 0
    // Predicated region
    $region2: #{tpu_custom_call.1} parent=1 // pred_check
      _
    $region3: #{tpu_custom_call.1} parent=1 // pred_check_branch
      %17 = sbr.rel (0) target = $region5
    $region4: #{tpu_custom_call.1} parent=1 // pred_region
      %s19 = ssub.s32 1600, 1600
      %20 = vsyncadd [#allocation3], %s19
      %s21 = sshll.u32 [#allocation2], 4
      %s22 = int_to_ptr.vmem [resolvable:$true] %s21
      %27 = dma.hbm_to_vmem [thread:$0]  %s0, 1600, %s22, [#allocation3], 64, 64, 4
    $region5: #{tpu_custom_call.1} parent=1 // pred_fallthru
      _
    // Predicated region
    $region6: #{tpu_custom_call.1} parent=1 // pred_check
      _
    $region7: #{tpu_custom_call.1} parent=1 // pred_check_branch
      %29 = sbr.rel (0) target = $region9
    $region8: #{tpu_custom_call.1} parent=1 // pred_region
      %s31 = ssub.s32 1024, 1024
      %32 = vsyncadd [#allocation6], %s31
      %s33 = sshll.u32 [#allocation5], 4
      %s34 = int_to_ptr.vmem [resolvable:$true] %s33
      %39 = dma.hbm_to_vmem [thread:$0]  %s1, 1024, %s34, [#allocation6], 64, 64, 4
    $region9: #{tpu_custom_call.1} parent=1 // pred_fallthru
      _
    // Predicated region
    $region10: #{tpu_custom_call.1} parent=1 // pred_check
      _
    $region11: #{tpu_custom_call.1} parent=1 // pred_check_branch
      %41 = sbr.rel (0) target = $region13
    $region12: #{tpu_custom_call.1} parent=1 // pred_region
      _
    $region13: #{tpu_custom_call.1} parent=1 // pred_fallthru
      _
    // Predicated region
    $region14: #{tpu_custom_call.1} parent=1 // pred_check
      _
    $region15: #{tpu_custom_call.1} parent=1 // pred_check_branch
      %43 = sbr.rel (0) target = $region17
    $region16: #{tpu_custom_call.1} parent=1 // pred_region
      %s45 = ssub.s32 6144, 6144
      %46 = vsyncadd [#allocation6], %s45
      %s47 = sshll.u32 [#allocation7], 4
      %s48 = int_to_ptr.vmem [resolvable:$true] %s47
      %53 = dma.hbm_to_vmem [thread:$0]  %s3, 6144, %s48, [#allocation6], 64, 64, 4
    $region17: #{tpu_custom_call.1} parent=1 // pred_fallthru
      _
    // Predicated region
    $region18: #{tpu_custom_call.1} parent=1 // pred_check
      _
    $region19: #{tpu_custom_call.1} parent=1 // pred_check_branch
      %55 = sbr.rel (0) target = $region21
    $region20: #{tpu_custom_call.1} parent=1 // pred_region
      _
    $region21: #{tpu_custom_call.1} parent=1 // pred_fallthru
      _
    // Predicated region
    $region22: #{tpu_custom_call.1} parent=1 // pred_check
      _
    $region23: #{tpu_custom_call.1} parent=1 // pred_check_branch
      %57 = sbr.rel (0) target = $region25
    $region24: #{tpu_custom_call.1} parent=1 // pred_region
      %s59 = ssub.s32 1024, 1024
      %60 = vsyncadd [#allocation9], %s59
      %s61 = sshll.u32 [#allocation8], 4
      %s62 = int_to_ptr.vmem [resolvable:$true] %s61
      %67 = dma.hbm_to_vmem [thread:$0]  %s5, 1024, %s62, [#allocation9], 64, 64, 4
    $region25: #{tpu_custom_call.1} parent=1 // pred_fallthru
      _
    // Predicated region
    $region26: #{tpu_custom_call.1} parent=1 // pred_check
      _
    $region27: #{tpu_custom_call.1} parent=1 // pred_check_branch
      %69 = sbr.rel (0) target = $region29
    $region28: #{tpu_custom_call.1} parent=1 // pred_region
      _
    $region29: #{tpu_custom_call.1} parent=1 // pred_fallthru
      _
    // Predicated region
    $region30: #{tpu_custom_call.1} parent=1 // pred_check
      _
    $region31: #{tpu_custom_call.1} parent=1 // pred_check_branch
      %71 = sbr.rel (0) target = $region33
    $region32: #{tpu_custom_call.1} parent=1 // pred_region
      %72 = dma.done [#allocation3], 1600
    $region33: #{tpu_custom_call.1} parent=1 // pred_fallthru
      _
    // Predicated region
    $region34: #{tpu_custom_call.1} parent=1 // pred_check
      _
    $region35: #{tpu_custom_call.1} parent=1 // pred_check_branch
      %74 = sbr.rel (0) target = $region37
    $region36: #{tpu_custom_call.1} parent=1 // pred_region
      %75 = dma.done [#allocation6], 1024
    $region37: #{tpu_custom_call.1} parent=1 // pred_fallthru
      _
    // Predicated region
    $region38: #{tpu_custom_call.1} parent=1 // pred_check
      _
    $region39: #{tpu_custom_call.1} parent=1 // pred_check_branch
      %77 = sbr.rel (0) target = $region41
    $region40: #{tpu_custom_call.1} parent=1 // pred_region
      %78 = dma.done [#allocation6], 6144
    $region41: #{tpu_custom_call.1} parent=1 // pred_fallthru
      _
    // Predicated region
    $region42: #{tpu_custom_call.1} parent=1 // pred_check
      _
    $region43: #{tpu_custom_call.1} parent=1 // pred_check_branch
      %80 = sbr.rel (0) target = $region45
    $region44: #{tpu_custom_call.1} parent=1 // pred_region
      %81 = dma.done [#allocation9], 1024
    $region45: #{tpu_custom_call.1} parent=1 // pred_fallthru
      _
    %v83 = vld [vmem:[#allocation2] sm:$0xf]
    %v84 = vld [vmem:[#allocation2 + $0x4] sm:$0xf]
    %v85 = vld [vmem:[#allocation2 + $0x8] sm:$0xf]
    %v86 = vld [vmem:[#allocation2 + $0xc] sm:$0xf]
    %v87 = vld [vmem:[#allocation2 + $0x10] sm:$0xf]
    %v88 = vld [vmem:[#allocation2 + $0x14] sm:$0xf]
    %v89 = vld [vmem:[#allocation2 + $0x18] sm:$0xf]
    %v90 = vld [vmem:[#allocation2 + $0x1c] sm:$0xf]
    %v91 = vld [vmem:[#allocation2 + $0x20] sm:$0xf]
    %v92 = vld [vmem:[#allocation2 + $0x24] sm:$0xf]
    %v93 = vld [vmem:[#allocation2 + $0x28] sm:$0xf]
    %v94 = vld [vmem:[#allocation2 + $0x2c] sm:$0xf]
    %v95 = vld [vmem:[#allocation2 + $0x30] sm:$0xf]
    %v96 = vld [vmem:[#allocation2 + $0x34] sm:$0xf]
    %v97 = vld [vmem:[#allocation2 + $0x38] sm:$0xf]
    %v98 = vld [vmem:[#allocation2 + $0x3c] sm:$0xf]
    %v99 = vld [vmem:[#allocation2 + $0x40] sm:$0xf]
    %v100 = vld [vmem:[#allocation2 + $0x44] sm:$0xf]
    %v101 = vld [vmem:[#allocation2 + $0x48] sm:$0xf]
    %v102 = vld [vmem:[#allocation2 + $0x4c] sm:$0xf]
    %v103 = vld [vmem:[#allocation2 + $0x50] sm:$0xf]
    %v104 = vld [vmem:[#allocation2 + $0x54] sm:$0xf]
    %v105 = vld [vmem:[#allocation2 + $0x58] sm:$0xf]
    %v106 = vld [vmem:[#allocation2 + $0x5c] sm:$0xf]
    %v107 = vld [vmem:[#allocation2 + $0x60] sm:$0xf]
    %v108 = vld [vmem:[#allocation5] sm:$0xf]
    %v109 = vld [vmem:[#allocation5 + $0x4] sm:$0xf]
    %v110 = vld [vmem:[#allocation5 + $0x8] sm:$0xf]
    %v111 = vld [vmem:[#allocation5 + $0xc] sm:$0xf]
    %v112 = vld [vmem:[#allocation5 + $0x10] sm:$0xf]
    %v113 = vld [vmem:[#allocation5 + $0x14] sm:$0xf]
    %v114 = vld [vmem:[#allocation5 + $0x18] sm:$0xf]
    %v115 = vld [vmem:[#allocation5 + $0x1c] sm:$0xf]
    %v116 = vld [vmem:[#allocation5 + $0x20] sm:$0xf]
    %v117 = vld [vmem:[#allocation5 + $0x24] sm:$0xf]
    %v118 = vld [vmem:[#allocation5 + $0x28] sm:$0xf]
    %v119 = vld [vmem:[#allocation5 + $0x2c] sm:$0xf]
    %v120 = vld [vmem:[#allocation5 + $0x30] sm:$0xf]
    %v121 = vld [vmem:[#allocation5 + $0x34] sm:$0xf]
    %v122 = vld [vmem:[#allocation5 + $0x38] sm:$0xf]
    %v123 = vld [vmem:[#allocation5 + $0x3c] sm:$0xf]
    %v124 = vld [vmem:[%s2] sm:$0x1]
    %v126 = vlaneseq
    %v127 = vshrl.u32 %v126, 7
    %v128 = vsub.s32 0, %v127
    %v129 = vrot.slane %v124, %v128
    %v156 = vunpack.c.l.b16 %v83
    %v157 = vunpack.c.l.b16 %v84
    %v158 = vunpack.c.l.b16 %v85
    %v159 = vunpack.c.l.b16 %v86
    %v160 = vunpack.c.l.b16 %v87
    %v161 = vunpack.c.l.b16 %v88
    %v162 = vunpack.c.l.b16 %v89
    %v163 = vunpack.c.l.b16 %v90
    %v164 = vunpack.c.l.b16 %v91
    %v165 = vunpack.c.l.b16 %v92
    %v166 = vunpack.c.l.b16 %v93
    %v167 = vunpack.c.l.b16 %v94
    %v168 = vunpack.c.l.b16 %v95
    %v169 = vunpack.c.l.b16 %v96
    %v170 = vunpack.c.l.b16 %v97
    %v171 = vunpack.c.l.b16 %v98
    %v172 = vunpack.c.l.b16 %v99
    %v173 = vunpack.c.l.b16 %v100
    %v174 = vunpack.c.l.b16 %v101
    %v175 = vunpack.c.l.b16 %v102
    %v176 = vunpack.c.l.b16 %v103
    %v177 = vunpack.c.l.b16 %v104
    %v178 = vunpack.c.l.b16 %v105
    %v179 = vunpack.c.l.b16 %v106
    %v180 = vunpack.c.l.b16 %v107
    %v181 = vpack.c.b16 %v157, %v156
    %v182 = vpack.c.b16 %v159, %v158
    %v183 = vpack.c.b16 %v161, %v160
    %v184 = vpack.c.b16 %v163, %v162
    %v185 = vpack.c.b16 %v165, %v164
    %v186 = vpack.c.b16 %v167, %v166
    %v187 = vpack.c.b16 %v169, %v168
    %v188 = vpack.c.b16 %v171, %v170
    %v189 = vpack.c.b16 %v173, %v172
    %v190 = vpack.c.b16 %v175, %v174
    %v191 = vpack.c.b16 %v177, %v176
    %v192 = vpack.c.b16 %v179, %v178
    %v193 = vpack.c.b16 %v180, %v180
    %v223 = vunpack.c.l.b16 %v108
    %v224 = vunpack.c.l.b16 %v109
    %v225 = vunpack.c.l.b16 %v110
    %v226 = vunpack.c.l.b16 %v111
    %v227 = vunpack.c.l.b16 %v112
    %v228 = vunpack.c.l.b16 %v113
    %v229 = vunpack.c.l.b16 %v114
    %v230 = vunpack.c.l.b16 %v115
    %v231 = vunpack.c.l.b16 %v116
    %v232 = vunpack.c.l.b16 %v117
    %v233 = vunpack.c.l.b16 %v118
    %v234 = vunpack.c.l.b16 %v119
    %v235 = vunpack.c.l.b16 %v120
    %v236 = vunpack.c.l.b16 %v121
    %v237 = vunpack.c.l.b16 %v122
    %v238 = vunpack.c.l.b16 %v123
    %v239 = vpack.c.b16 %v224, %v223
    %v240 = vpack.c.b16 %v226, %v225
    %v241 = vpack.c.b16 %v228, %v227
    %v242 = vpack.c.b16 %v230, %v229
    %v243 = vpack.c.b16 %v232, %v231
    %v244 = vpack.c.b16 %v234, %v233
    %v245 = vpack.c.b16 %v236, %v235
    %v246 = vpack.c.b16 %v238, %v237
    %255 = vmatprep.subr.bf16.mxu0 0
    %256 = vmatpush1.bf16.msra.mxu0 %v239
    %257 = vmatprep.subr.bf16.mxu0 0
    %258 = vmatpush1.bf16.msra.mxu0 %v240
    %259 = vmatprep.subr.bf16.mxu0 0
    %260 = vmatpush1.bf16.msra.mxu0 %v241
    %261 = vmatprep.subr.bf16.mxu0 0
    %262 = vmatpush1.bf16.msra.mxu0 %v242
    %263 = vmatprep.subr.bf16.mxu0 0
    %264 = vmatpush1.bf16.msra.mxu0 %v243
    %265 = vmatprep.subr.bf16.mxu0 0
    %266 = vmatpush1.bf16.msra.mxu0 %v244
    %267 = vmatprep.subr.bf16.mxu0 0
    %268 = vmatpush1.bf16.msra.mxu0 %v245
    %269 = vmatprep.subr.bf16.mxu0 0
    %270 = vmatpush1.bf16.msra.mxu0 %v246
    %271 = vmatprep.subr.bf16.mxu0 0
    %272 = vmatpush1.bf16.msra.mxu0 0
    %273 = vmatprep.subr.bf16.mxu0 0
    %274 = vmatpush1.bf16.msra.mxu0 0
    %275 = vmatprep.subr.bf16.mxu0 0
    %276 = vmatpush1.bf16.msra.mxu0 0
    %277 = vmatprep.subr.bf16.mxu0 0
    %278 = vmatpush1.bf16.msra.mxu0 0
    %279 = vmatprep.subr.bf16.mxu0 0
    %280 = vmatpush1.bf16.msra.mxu0 0
    %281 = vmatprep.subr.bf16.mxu0 0
    %282 = vmatpush1.bf16.msra.mxu0 0
    %283 = vmatprep.subr.bf16.mxu0 0
    %284 = vmatpush1.bf16.msra.mxu0 0
    %285 = vmatprep.subr.bf16.mxu0 0
    %286 = vmatpush1.bf16.msra.mxu0 0
    %287 = vmatprep.mubr.bf16.mxu0 0
    %288 = vmatmul.mubr.bf16.gmra.mrb[0].mxu0 %v181
    %v289 = vpop.f32.mrb[0].mxu0
    %v290 = vadd.f32 %v129, %v289
    %v291 = vpop.f32.mrb[0].mxu0
    %v292 = vpop.f32.mrb[0].mxu0
    %v293 = vadd.f32 %v129, %v292
    %v294 = vpop.f32.mrb[0].mxu0
    %295 = vmatprep.mubr.bf16.mxu0 0
    %296 = vmatmul.mubr.bf16.gmra.mrb[0].mxu0 %v182
    %v297 = vpop.f32.mrb[0].mxu0
    %v298 = vadd.f32 %v129, %v297
    %v299 = vpop.f32.mrb[0].mxu0
    %v300 = vpop.f32.mrb[0].mxu0
    %v301 = vadd.f32 %v129, %v300
    %v302 = vpop.f32.mrb[0].mxu0
    %303 = vmatprep.mubr.bf16.mxu0 0
    %304 = vmatmul.mubr.bf16.gmra.mrb[0].mxu0 %v183
    %v305 = vpop.f32.mrb[0].mxu0
    %v306 = vadd.f32 %v129, %v305
    %v307 = vpop.f32.mrb[0].mxu0
    %v308 = vpop.f32.mrb[0].mxu0
    %v309 = vadd.f32 %v129, %v308
    %v310 = vpop.f32.mrb[0].mxu0
    %311 = vmatprep.mubr.bf16.mxu0 0
    %312 = vmatmul.mubr.bf16.gmra.mrb[0].mxu0 %v184
    %v313 = vpop.f32.mrb[0].mxu0
    %v314 = vadd.f32 %v129, %v313
    %v315 = vpop.f32.mrb[0].mxu0
    %v316 = vpop.f32.mrb[0].mxu0
    %v317 = vadd.f32 %v129, %v316
    %v318 = vpop.f32.mrb[0].mxu0
    %319 = vmatprep.mubr.bf16.mxu0 0
    %320 = vmatmul.mubr.bf16.gmra.mrb[0].mxu0 %v185
    %v321 = vpop.f32.mrb[0].mxu0
    %v322 = vadd.f32 %v129, %v321
    %v323 = vpop.f32.mrb[0].mxu0
    %v324 = vpop.f32.mrb[0].mxu0
    %v325 = vadd.f32 %v129, %v324
    %v326 = vpop.f32.mrb[0].mxu0
    %327 = vmatprep.mubr.bf16.mxu0 0
    %328 = vmatmul.mubr.bf16.gmra.mrb[0].mxu0 %v186
    %v329 = vpop.f32.mrb[0].mxu0
    %v330 = vadd.f32 %v129, %v329
    %v331 = vpop.f32.mrb[0].mxu0
    %v332 = vpop.f32.mrb[0].mxu0
    %v333 = vadd.f32 %v129, %v332
    %v334 = vpop.f32.mrb[0].mxu0
    %335 = vmatprep.mubr.bf16.mxu0 0
    %336 = vmatmul.mubr.bf16.gmra.mrb[0].mxu0 %v187
    %v337 = vpop.f32.mrb[0].mxu0
    %v338 = vadd.f32 %v129, %v337
    %v339 = vpop.f32.mrb[0].mxu0
    %v340 = vpop.f32.mrb[0].mxu0
    %v341 = vadd.f32 %v129, %v340
    %v342 = vpop.f32.mrb[0].mxu0
    %343 = vmatprep.mubr.bf16.mxu0 0
    %344 = vmatmul.mubr.bf16.gmra.mrb[0].mxu0 %v188
    %v345 = vpop.f32.mrb[0].mxu0
    %v346 = vadd.f32 %v129, %v345
    %v347 = vpop.f32.mrb[0].mxu0
    %v348 = vpop.f32.mrb[0].mxu0
    %v349 = vadd.f32 %v129, %v348
    %v350 = vpop.f32.mrb[0].mxu0
    %351 = vmatprep.mubr.bf16.mxu0 0
    %352 = vmatmul.mubr.bf16.gmra.mrb[0].mxu0 %v189
    %v353 = vpop.f32.mrb[0].mxu0
    %v354 = vadd.f32 %v129, %v353
    %v355 = vpop.f32.mrb[0].mxu0
    %v356 = vpop.f32.mrb[0].mxu0
    %v357 = vadd.f32 %v129, %v356
    %v358 = vpop.f32.mrb[0].mxu0
    %359 = vmatprep.mubr.bf16.mxu0 0
    %360 = vmatmul.mubr.bf16.gmra.mrb[0].mxu0 %v190
    %v361 = vpop.f32.mrb[0].mxu0
    %v362 = vadd.f32 %v129, %v361
    %v363 = vpop.f32.mrb[0].mxu0
    %v364 = vpop.f32.mrb[0].mxu0
    %v365 = vadd.f32 %v129, %v364
    %v366 = vpop.f32.mrb[0].mxu0
    %367 = vmatprep.mubr.bf16.mxu0 0
    %368 = vmatmul.mubr.bf16.gmra.mrb[0].mxu0 %v191
    %v369 = vpop.f32.mrb[0].mxu0
    %v370 = vadd.f32 %v129, %v369
    %v371 = vpop.f32.mrb[0].mxu0
    %v372 = vpop.f32.mrb[0].mxu0
    %v373 = vadd.f32 %v129, %v372
    %v374 = vpop.f32.mrb[0].mxu0
    %375 = vmatprep.mubr.bf16.mxu0 0
    %376 = vmatmul.mubr.bf16.gmra.mrb[0].mxu0 %v192
    %v377 = vpop.f32.mrb[0].mxu0
    %v378 = vadd.f32 %v129, %v377
    %v379 = vpop.f32.mrb[0].mxu0
    %v380 = vpop.f32.mrb[0].mxu0
    %v381 = vadd.f32 %v129, %v380
    %v382 = vpop.f32.mrb[0].mxu0
    %383 = vmatprep.mubr.bf16.mxu0 0
    %384 = vmatmul.mubr.bf16.gmra.mrb[0].mxu0 %v193
    %v385 = vpop.f32.mrb[0].mxu0
    %v386 = vadd.f32 %v129, %v385
    %v387 = vpop.f32.mrb[0].mxu0
    %v388 = vpop.f32.mrb[0].mxu0
    %v389 = vpop.f32.mrb[0].mxu0
    %390 = vdwg.mxu0
    %v391 = vmax.f32 %v290, 0.0
    %v392 = vmax.f32 %v293, 0.0
    %v393 = vmax.f32 %v298, 0.0
    %v394 = vmax.f32 %v301, 0.0
    %v395 = vmax.f32 %v306, 0.0
    %v396 = vmax.f32 %v309, 0.0
    %v397 = vmax.f32 %v314, 0.0
    %v398 = vmax.f32 %v317, 0.0
    %v399 = vmax.f32 %v322, 0.0
    %v400 = vmax.f32 %v325, 0.0
    %v401 = vmax.f32 %v330, 0.0
    %v402 = vmax.f32 %v333, 0.0
    %v403 = vmax.f32 %v338, 0.0
    %v404 = vmax.f32 %v341, 0.0
    %v405 = vmax.f32 %v346, 0.0
    %v406 = vmax.f32 %v349, 0.0
    %v407 = vmax.f32 %v354, 0.0
    %v408 = vmax.f32 %v357, 0.0
    %v409 = vmax.f32 %v362, 0.0
    %v410 = vmax.f32 %v365, 0.0
    %v411 = vmax.f32 %v370, 0.0
    %v412 = vmax.f32 %v373, 0.0
    %v413 = vmax.f32 %v378, 0.0
    %v414 = vmax.f32 %v381, 0.0
    %v415 = vmax.f32 %v386, 0.0
    %v416 = vld [vmem:[#allocation7] sm:$0xf]
    %v417 = vld [vmem:[#allocation7 + $0x4] sm:$0xf]
    %v418 = vld [vmem:[#allocation7 + $0x8] sm:$0xf]
    %v419 = vld [vmem:[#allocation7 + $0xc] sm:$0xf]
    %v420 = vld [vmem:[#allocation7 + $0x10] sm:$0xf]
    %v421 = vld [vmem:[#allocation7 + $0x14] sm:$0xf]
    %v422 = vld [vmem:[#allocation7 + $0x18] sm:$0xf]
    %v423 = vld [vmem:[#allocation7 + $0x1c] sm:$0xf]
    %v424 = vld [vmem:[#allocation7 + $0x20] sm:$0xf]
    %v425 = vld [vmem:[#allocation7 + $0x24] sm:$0xf]
    %v426 = vld [vmem:[#allocation7 + $0x28] sm:$0xf]
    %v427 = vld [vmem:[#allocation7 + $0x2c] sm:$0xf]
    %v428 = vld [vmem:[#allocation7 + $0x30] sm:$0xf]
    %v429 = vld [vmem:[#allocation7 + $0x34] sm:$0xf]
    %v430 = vld [vmem:[#allocation7 + $0x38] sm:$0xf]
    %v431 = vld [vmem:[#allocation7 + $0x3c] sm:$0xf]
    %v432 = vld [vmem:[%s4] sm:$0x1]
    %v433 = vpack.c.bf16 %v392, %v391
    %v434 = vpack.c.bf16 %v394, %v393
    %v435 = vpack.c.bf16 %v396, %v395
    %v436 = vpack.c.bf16 %v398, %v397
    %v437 = vpack.c.bf16 %v400, %v399
    %v438 = vpack.c.bf16 %v402, %v401
    %v439 = vpack.c.bf16 %v404, %v403
    %v440 = vpack.c.bf16 %v406, %v405
    %v441 = vpack.c.bf16 %v408, %v407
    %v442 = vpack.c.bf16 %v410, %v409
    %v443 = vpack.c.bf16 %v412, %v411
    %v444 = vpack.c.bf16 %v414, %v413
    %v445 = vpack.c.bf16 %v415, %v415
    %v447 = vlaneseq
    %v448 = vshrl.u32 %v447, 7
    %v449 = vsub.s32 0, %v448
    %v450 = vrot.slane %v432, %v449
    %v468 = vunpack.c.l.b16 %v416
    %v469 = vunpack.c.l.b16 %v417
    %v470 = vunpack.c.l.b16 %v418
    %v471 = vunpack.c.l.b16 %v419
    %v472 = vunpack.c.l.b16 %v420
    %v473 = vunpack.c.l.b16 %v421
    %v474 = vunpack.c.l.b16 %v422
    %v475 = vunpack.c.l.b16 %v423
    %v476 = vunpack.c.l.b16 %v424
    %v477 = vunpack.c.l.b16 %v425
    %v478 = vunpack.c.l.b16 %v426
    %v479 = vunpack.c.l.b16 %v427
    %v480 = vunpack.c.l.b16 %v428
    %v481 = vunpack.c.l.b16 %v429
    %v482 = vunpack.c.l.b16 %v430
    %v483 = vunpack.c.l.b16 %v431
    %v484 = vpack.c.b16 %v469, %v468
    %v485 = vpack.c.b16 %v471, %v470
    %v486 = vpack.c.b16 %v473, %v472
    %v487 = vpack.c.b16 %v475, %v474
    %v488 = vpack.c.b16 %v477, %v476
    %v489 = vpack.c.b16 %v479, %v478
    %v490 = vpack.c.b16 %v481, %v480
    %v491 = vpack.c.b16 %v483, %v482
    %500 = vmatprep.subr.bf16.mxu0 0
    %501 = vmatpush1.bf16.msra.mxu0 %v484
    %502 = vmatprep.subr.bf16.mxu0 0
    %503 = vmatpush1.bf16.msra.mxu0 %v485
    %504 = vmatprep.subr.bf16.mxu0 0
    %505 = vmatpush1.bf16.msra.mxu0 %v486
    %506 = vmatprep.subr.bf16.mxu0 0
    %507 = vmatpush1.bf16.msra.mxu0 %v487
    %508 = vmatprep.subr.bf16.mxu0 0
    %509 = vmatpush1.bf16.msra.mxu0 %v488
    %510 = vmatprep.subr.bf16.mxu0 0
    %511 = vmatpush1.bf16.msra.mxu0 %v489
    %512 = vmatprep.subr.bf16.mxu0 0
    %513 = vmatpush1.bf16.msra.mxu0 %v490
    %514 = vmatprep.subr.bf16.mxu0 0
    %515 = vmatpush1.bf16.msra.mxu0 %v491
    %516 = vmatprep.subr.bf16.mxu0 0
    %517 = vmatpush1.bf16.msra.mxu0 0
    %518 = vmatprep.subr.bf16.mxu0 0
    %519 = vmatpush1.bf16.msra.mxu0 0
    %520 = vmatprep.subr.bf16.mxu0 0
    %521 = vmatpush1.bf16.msra.mxu0 0
    %522 = vmatprep.subr.bf16.mxu0 0
    %523 = vmatpush1.bf16.msra.mxu0 0
    %524 = vmatprep.subr.bf16.mxu0 0
    %525 = vmatpush1.bf16.msra.mxu0 0
    %526 = vmatprep.subr.bf16.mxu0 0
    %527 = vmatpush1.bf16.msra.mxu0 0
    %528 = vmatprep.subr.bf16.mxu0 0
    %529 = vmatpush1.bf16.msra.mxu0 0
    %530 = vmatprep.subr.bf16.mxu0 0
    %531 = vmatpush1.bf16.msra.mxu0 0
    %532 = vmatprep.mubr.bf16.mxu0 0
    %533 = vmatmul.mubr.bf16.gmra.mrb[0].mxu0 %v433
    %v534 = vpop.f32.mrb[0].mxu0
    %v535 = vadd.f32 %v450, %v534
    %v536 = vpop.f32.mrb[0].mxu0
    %v537 = vpop.f32.mrb[0].mxu0
    %v538 = vadd.f32 %v450, %v537
    %v539 = vpop.f32.mrb[0].mxu0
    %540 = vmatprep.mubr.bf16.mxu0 0
    %541 = vmatmul.mubr.bf16.gmra.mrb[0].mxu0 %v434
    %v542 = vpop.f32.mrb[0].mxu0
    %v543 = vadd.f32 %v450, %v542
    %v544 = vpop.f32.mrb[0].mxu0
    %v545 = vpop.f32.mrb[0].mxu0
    %v546 = vadd.f32 %v450, %v545
    %v547 = vpop.f32.mrb[0].mxu0
    %548 = vmatprep.mubr.bf16.mxu0 0
    %549 = vmatmul.mubr.bf16.gmra.mrb[0].mxu0 %v435
    %v550 = vpop.f32.mrb[0].mxu0
    %v551 = vadd.f32 %v450, %v550
    %v552 = vpop.f32.mrb[0].mxu0
    %v553 = vpop.f32.mrb[0].mxu0
    %v554 = vadd.f32 %v450, %v553
    %v555 = vpop.f32.mrb[0].mxu0
    %556 = vmatprep.mubr.bf16.mxu0 0
    %557 = vmatmul.mubr.bf16.gmra.mrb[0].mxu0 %v436
    %v558 = vpop.f32.mrb[0].mxu0
    %v559 = vadd.f32 %v450, %v558
    %v560 = vpop.f32.mrb[0].mxu0
    %v561 = vpop.f32.mrb[0].mxu0
    %v562 = vadd.f32 %v450, %v561
    %v563 = vpop.f32.mrb[0].mxu0
    %564 = vmatprep.mubr.bf16.mxu0 0
    %565 = vmatmul.mubr.bf16.gmra.mrb[0].mxu0 %v437
    %v566 = vpop.f32.mrb[0].mxu0
    %v567 = vadd.f32 %v450, %v566
    %v568 = vpop.f32.mrb[0].mxu0
    %v569 = vpop.f32.mrb[0].mxu0
    %v570 = vadd.f32 %v450, %v569
    %v571 = vpop.f32.mrb[0].mxu0
    %572 = vmatprep.mubr.bf16.mxu0 0
    %573 = vmatmul.mubr.bf16.gmra.mrb[0].mxu0 %v438
    %v574 = vpop.f32.mrb[0].mxu0
    %v575 = vadd.f32 %v450, %v574
    %v576 = vpop.f32.mrb[0].mxu0
    %v577 = vpop.f32.mrb[0].mxu0
    %v578 = vadd.f32 %v450, %v577
    %v579 = vpop.f32.mrb[0].mxu0
    %580 = vmatprep.mubr.bf16.mxu0 0
    %581 = vmatmul.mubr.bf16.gmra.mrb[0].mxu0 %v439
    %v582 = vpop.f32.mrb[0].mxu0
    %v583 = vadd.f32 %v450, %v582
    %v584 = vpop.f32.mrb[0].mxu0
    %v585 = vpop.f32.mrb[0].mxu0
    %v586 = vadd.f32 %v450, %v585
    %v587 = vpop.f32.mrb[0].mxu0
    %588 = vmatprep.mubr.bf16.mxu0 0
    %589 = vmatmul.mubr.bf16.gmra.mrb[0].mxu0 %v440
    %v590 = vpop.f32.mrb[0].mxu0
    %v591 = vadd.f32 %v450, %v590
    %v592 = vpop.f32.mrb[0].mxu0
    %v593 = vpop.f32.mrb[0].mxu0
    %v594 = vadd.f32 %v450, %v593
    %v595 = vpop.f32.mrb[0].mxu0
    %596 = vmatprep.mubr.bf16.mxu0 0
    %597 = vmatmul.mubr.bf16.gmra.mrb[0].mxu0 %v441
    %v598 = vpop.f32.mrb[0].mxu0
    %v599 = vadd.f32 %v450, %v598
    %v600 = vpop.f32.mrb[0].mxu0
    %v601 = vpop.f32.mrb[0].mxu0
    %v602 = vadd.f32 %v450, %v601
    %v603 = vpop.f32.mrb[0].mxu0
    %604 = vmatprep.mubr.bf16.mxu0 0
    %605 = vmatmul.mubr.bf16.gmra.mrb[0].mxu0 %v442
    %v606 = vpop.f32.mrb[0].mxu0
    %v607 = vadd.f32 %v450, %v606
    %v608 = vpop.f32.mrb[0].mxu0
    %v609 = vpop.f32.mrb[0].mxu0
    %v610 = vadd.f32 %v450, %v609
    %v611 = vpop.f32.mrb[0].mxu0
    %612 = vmatprep.mubr.bf16.mxu0 0
    %613 = vmatmul.mubr.bf16.gmra.mrb[0].mxu0 %v443
    %v614 = vpop.f32.mrb[0].mxu0
    %v615 = vadd.f32 %v450, %v614
    %v616 = vpop.f32.mrb[0].mxu0
    %v617 = vpop.f32.mrb[0].mxu0
    %v618 = vadd.f32 %v450, %v617
    %v619 = vpop.f32.mrb[0].mxu0
    %620 = vmatprep.mubr.bf16.mxu0 0
    %621 = vmatmul.mubr.bf16.gmra.mrb[0].mxu0 %v444
    %v622 = vpop.f32.mrb[0].mxu0
    %v623 = vadd.f32 %v450, %v622
    %v624 = vpop.f32.mrb[0].mxu0
    %v625 = vpop.f32.mrb[0].mxu0
    %v626 = vadd.f32 %v450, %v625
    %v627 = vpop.f32.mrb[0].mxu0
    %628 = vmatprep.mubr.bf16.mxu0 0
    %629 = vmatmul.mubr.bf16.gmra.mrb[0].mxu0 %v445
    %v630 = vpop.f32.mrb[0].mxu0
    %v631 = vadd.f32 %v450, %v630
    %v632 = vpop.f32.mrb[0].mxu0
    %v633 = vpop.f32.mrb[0].mxu0
    %v634 = vpop.f32.mrb[0].mxu0
    %635 = vdwg.mxu0
    %v636 = vmax.f32 %v535, 0.0
    %v637 = vmax.f32 %v538, 0.0
    %v638 = vmax.f32 %v543, 0.0
    %v639 = vmax.f32 %v546, 0.0
    %v640 = vmax.f32 %v551, 0.0
    %v641 = vmax.f32 %v554, 0.0
    %v642 = vmax.f32 %v559, 0.0
    %v643 = vmax.f32 %v562, 0.0
    %v644 = vmax.f32 %v567, 0.0
    %v645 = vmax.f32 %v570, 0.0
    %v646 = vmax.f32 %v575, 0.0
    %v647 = vmax.f32 %v578, 0.0
    %v648 = vmax.f32 %v583, 0.0
    %v649 = vmax.f32 %v586, 0.0
    %v650 = vmax.f32 %v591, 0.0
    %v651 = vmax.f32 %v594, 0.0
    %v652 = vmax.f32 %v599, 0.0
    %v653 = vmax.f32 %v602, 0.0
    %v654 = vmax.f32 %v607, 0.0
    %v655 = vmax.f32 %v610, 0.0
    %v656 = vmax.f32 %v615, 0.0
    %v657 = vmax.f32 %v618, 0.0
    %v658 = vmax.f32 %v623, 0.0
    %v659 = vmax.f32 %v626, 0.0
    %v660 = vmax.f32 %v631, 0.0
    %s661 = scalar_lea.vmem [#allocation7], 64
    %v662 = vld [vmem:[%s661] sm:$0xf]
    %v663 = vld [vmem:[%s661 + $0x4] sm:$0xf]
    %v664 = vld [vmem:[%s661 + $0x8] sm:$0xf]
    %v665 = vld [vmem:[%s661 + $0xc] sm:$0xf]
    %v666 = vld [vmem:[%s661 + $0x10] sm:$0xf]
    %v667 = vld [vmem:[%s661 + $0x14] sm:$0xf]
    %v668 = vld [vmem:[%s661 + $0x18] sm:$0xf]
    %v669 = vld [vmem:[%s661 + $0x1c] sm:$0xf]
    %v670 = vld [vmem:[%s661 + $0x20] sm:$0xf]
    %v671 = vld [vmem:[%s661 + $0x24] sm:$0xf]
    %v672 = vld [vmem:[%s661 + $0x28] sm:$0xf]
    %v673 = vld [vmem:[%s661 + $0x2c] sm:$0xf]
    %v674 = vld [vmem:[%s661 + $0x30] sm:$0xf]
    %v675 = vld [vmem:[%s661 + $0x34] sm:$0xf]
    %v676 = vld [vmem:[%s661 + $0x38] sm:$0xf]
    %v677 = vld [vmem:[%s661 + $0x3c] sm:$0xf]
    %s678 = scalar_lea.vmem %s4, 1
    %v679 = vld [vmem:[%s678] sm:$0x1]
    %v680 = vpack.c.bf16 %v637, %v636
    %v681 = vpack.c.bf16 %v639, %v638
    %v682 = vpack.c.bf16 %v641, %v640
    %v683 = vpack.c.bf16 %v643, %v642
    %v684 = vpack.c.bf16 %v645, %v644
    %v685 = vpack.c.bf16 %v647, %v646
    %v686 = vpack.c.bf16 %v649, %v648
    %v687 = vpack.c.bf16 %v651, %v650
    %v688 = vpack.c.bf16 %v653, %v652
    %v689 = vpack.c.bf16 %v655, %v654
    %v690 = vpack.c.bf16 %v657, %v656
    %v691 = vpack.c.bf16 %v659, %v658
    %v692 = vpack.c.bf16 %v660, %v660
    %v694 = vlaneseq
    %v695 = vshrl.u32 %v694, 7
    %v696 = vsub.s32 0, %v695
    %v697 = vrot.slane %v679, %v696
    %v715 = vunpack.c.l.b16 %v662
    %v716 = vunpack.c.l.b16 %v663
    %v717 = vunpack.c.l.b16 %v664
    %v718 = vunpack.c.l.b16 %v665
    %v719 = vunpack.c.l.b16 %v666
    %v720 = vunpack.c.l.b16 %v667
    %v721 = vunpack.c.l.b16 %v668
    %v722 = vunpack.c.l.b16 %v669
    %v723 = vunpack.c.l.b16 %v670
    %v724 = vunpack.c.l.b16 %v671
    %v725 = vunpack.c.l.b16 %v672
    %v726 = vunpack.c.l.b16 %v673
    %v727 = vunpack.c.l.b16 %v674
    %v728 = vunpack.c.l.b16 %v675
    %v729 = vunpack.c.l.b16 %v676
    %v730 = vunpack.c.l.b16 %v677
    %v731 = vpack.c.b16 %v716, %v715
    %v732 = vpack.c.b16 %v718, %v717
    %v733 = vpack.c.b16 %v720, %v719
    %v734 = vpack.c.b16 %v722, %v721
    %v735 = vpack.c.b16 %v724, %v723
    %v736 = vpack.c.b16 %v726, %v725
    %v737 = vpack.c.b16 %v728, %v727
    %v738 = vpack.c.b16 %v730, %v729
    %747 = vmatprep.subr.bf16.mxu0 0
    %748 = vmatpush1.bf16.msra.mxu0 %v731
    %749 = vmatprep.subr.bf16.mxu0 0
    %750 = vmatpush1.bf16.msra.mxu0 %v732
    %751 = vmatprep.subr.bf16.mxu0 0
    %752 = vmatpush1.bf16.msra.mxu0 %v733
    %753 = vmatprep.subr.bf16.mxu0 0
    %754 = vmatpush1.bf16.msra.mxu0 %v734
    %755 = vmatprep.subr.bf16.mxu0 0
    %756 = vmatpush1.bf16.msra.mxu0 %v735
    %757 = vmatprep.subr.bf16.mxu0 0
    %758 = vmatpush1.bf16.msra.mxu0 %v736
    %759 = vmatprep.subr.bf16.mxu0 0
    %760 = vmatpush1.bf16.msra.mxu0 %v737
    %761 = vmatprep.subr.bf16.mxu0 0
    %762 = vmatpush1.bf16.msra.mxu0 %v738
    %763 = vmatprep.subr.bf16.mxu0 0
    %764 = vmatpush1.bf16.msra.mxu0 0
    %765 = vmatprep.subr.bf16.mxu0 0
    %766 = vmatpush1.bf16.msra.mxu0 0
    %767 = vmatprep.subr.bf16.mxu0 0
    %768 = vmatpush1.bf16.msra.mxu0 0
    %769 = vmatprep.subr.bf16.mxu0 0
    %770 = vmatpush1.bf16.msra.mxu0 0
    %771 = vmatprep.subr.bf16.mxu0 0
    %772 = vmatpush1.bf16.msra.mxu0 0
    %773 = vmatprep.subr.bf16.mxu0 0
    %774 = vmatpush1.bf16.msra.mxu0 0
    %775 = vmatprep.subr.bf16.mxu0 0
    %776 = vmatpush1.bf16.msra.mxu0 0
    %777 = vmatprep.subr.bf16.mxu0 0
    %778 = vmatpush1.bf16.msra.mxu0 0
    %779 = vmatprep.mubr.bf16.mxu0 0
    %780 = vmatmul.mubr.bf16.gmra.mrb[0].mxu0 %v680
    %v781 = vpop.f32.mrb[0].mxu0
    %v782 = vadd.f32 %v697, %v781
    %v783 = vpop.f32.mrb[0].mxu0
    %v784 = vpop.f32.mrb[0].mxu0
    %v785 = vadd.f32 %v697, %v784
    %v786 = vpop.f32.mrb[0].mxu0
    %787 = vmatprep.mubr.bf16.mxu0 0
    %788 = vmatmul.mubr.bf16.gmra.mrb[0].mxu0 %v681
    %v789 = vpop.f32.mrb[0].mxu0
    %v790 = vadd.f32 %v697, %v789
    %v791 = vpop.f32.mrb[0].mxu0
    %v792 = vpop.f32.mrb[0].mxu0
    %v793 = vadd.f32 %v697, %v792
    %v794 = vpop.f32.mrb[0].mxu0
    %795 = vmatprep.mubr.bf16.mxu0 0
    %796 = vmatmul.mubr.bf16.gmra.mrb[0].mxu0 %v682
    %v797 = vpop.f32.mrb[0].mxu0
    %v798 = vadd.f32 %v697, %v797
    %v799 = vpop.f32.mrb[0].mxu0
    %v800 = vpop.f32.mrb[0].mxu0
    %v801 = vadd.f32 %v697, %v800
    %v802 = vpop.f32.mrb[0].mxu0
    %803 = vmatprep.mubr.bf16.mxu0 0
    %804 = vmatmul.mubr.bf16.gmra.mrb[0].mxu0 %v683
    %v805 = vpop.f32.mrb[0].mxu0
    %v806 = vadd.f32 %v697, %v805
    %v807 = vpop.f32.mrb[0].mxu0
    %v808 = vpop.f32.mrb[0].mxu0
    %v809 = vadd.f32 %v697, %v808
    %v810 = vpop.f32.mrb[0].mxu0
    %811 = vmatprep.mubr.bf16.mxu0 0
    %812 = vmatmul.mubr.bf16.gmra.mrb[0].mxu0 %v684
    %v813 = vpop.f32.mrb[0].mxu0
    %v814 = vadd.f32 %v697, %v813
    %v815 = vpop.f32.mrb[0].mxu0
    %v816 = vpop.f32.mrb[0].mxu0
    %v817 = vadd.f32 %v697, %v816
    %v818 = vpop.f32.mrb[0].mxu0
    %819 = vmatprep.mubr.bf16.mxu0 0
    %820 = vmatmul.mubr.bf16.gmra.mrb[0].mxu0 %v685
    %v821 = vpop.f32.mrb[0].mxu0
    %v822 = vadd.f32 %v697, %v821
    %v823 = vpop.f32.mrb[0].mxu0
    %v824 = vpop.f32.mrb[0].mxu0
    %v825 = vadd.f32 %v697, %v824
    %v826 = vpop.f32.mrb[0].mxu0
    %827 = vmatprep.mubr.bf16.mxu0 0
    %828 = vmatmul.mubr.bf16.gmra.mrb[0].mxu0 %v686
    %v829 = vpop.f32.mrb[0].mxu0
    %v830 = vadd.f32 %v697, %v829
    %v831 = vpop.f32.mrb[0].mxu0
    %v832 = vpop.f32.mrb[0].mxu0
    %v833 = vadd.f32 %v697, %v832
    %v834 = vpop.f32.mrb[0].mxu0
    %835 = vmatprep.mubr.bf16.mxu0 0
    %836 = vmatmul.mubr.bf16.gmra.mrb[0].mxu0 %v687
    %v837 = vpop.f32.mrb[0].mxu0
    %v838 = vadd.f32 %v697, %v837
    %v839 = vpop.f32.mrb[0].mxu0
    %v840 = vpop.f32.mrb[0].mxu0
    %v841 = vadd.f32 %v697, %v840
    %v842 = vpop.f32.mrb[0].mxu0
    %843 = vmatprep.mubr.bf16.mxu0 0
    %844 = vmatmul.mubr.bf16.gmra.mrb[0].mxu0 %v688
    %v845 = vpop.f32.mrb[0].mxu0
    %v846 = vadd.f32 %v697, %v845
    %v847 = vpop.f32.mrb[0].mxu0
    %v848 = vpop.f32.mrb[0].mxu0
    %v849 = vadd.f32 %v697, %v848
    %v850 = vpop.f32.mrb[0].mxu0
    %851 = vmatprep.mubr.bf16.mxu0 0
    %852 = vmatmul.mubr.bf16.gmra.mrb[0].mxu0 %v689
    %v853 = vpop.f32.mrb[0].mxu0
    %v854 = vadd.f32 %v697, %v853
    %v855 = vpop.f32.mrb[0].mxu0
    %v856 = vpop.f32.mrb[0].mxu0
    %v857 = vadd.f32 %v697, %v856
    %v858 = vpop.f32.mrb[0].mxu0
    %859 = vmatprep.mubr.bf16.mxu0 0
    %860 = vmatmul.mubr.bf16.gmra.mrb[0].mxu0 %v690
    %v861 = vpop.f32.mrb[0].mxu0
    %v862 = vadd.f32 %v697, %v861
    %v863 = vpop.f32.mrb[0].mxu0
    %v864 = vpop.f32.mrb[0].mxu0
    %v865 = vadd.f32 %v697, %v864
    %v866 = vpop.f32.mrb[0].mxu0
    %867 = vmatprep.mubr.bf16.mxu0 0
    %868 = vmatmul.mubr.bf16.gmra.mrb[0].mxu0 %v691
    %v869 = vpop.f32.mrb[0].mxu0
    %v870 = vadd.f32 %v697, %v869
    %v871 = vpop.f32.mrb[0].mxu0
    %v872 = vpop.f32.mrb[0].mxu0
    %v873 = vadd.f32 %v697, %v872
    %v874 = vpop.f32.mrb[0].mxu0
    %875 = vmatprep.mubr.bf16.mxu0 0
    %876 = vmatmul.mubr.bf16.gmra.mrb[0].mxu0 %v692
    %v877 = vpop.f32.mrb[0].mxu0
    %v878 = vadd.f32 %v697, %v877
    %v879 = vpop.f32.mrb[0].mxu0
    %v880 = vpop.f32.mrb[0].mxu0
    %v881 = vpop.f32.mrb[0].mxu0
    %882 = vdwg.mxu0
    %v883 = vmax.f32 %v782, 0.0
    %v884 = vmax.f32 %v785, 0.0
    %v885 = vmax.f32 %v790, 0.0
    %v886 = vmax.f32 %v793, 0.0
    %v887 = vmax.f32 %v798, 0.0
    %v888 = vmax.f32 %v801, 0.0
    %v889 = vmax.f32 %v806, 0.0
    %v890 = vmax.f32 %v809, 0.0
    %v891 = vmax.f32 %v814, 0.0
    %v892 = vmax.f32 %v817, 0.0
    %v893 = vmax.f32 %v822, 0.0
    %v894 = vmax.f32 %v825, 0.0
    %v895 = vmax.f32 %v830, 0.0
    %v896 = vmax.f32 %v833, 0.0
    %v897 = vmax.f32 %v838, 0.0
    %v898 = vmax.f32 %v841, 0.0
    %v899 = vmax.f32 %v846, 0.0
    %v900 = vmax.f32 %v849, 0.0
    %v901 = vmax.f32 %v854, 0.0
    %v902 = vmax.f32 %v857, 0.0
    %v903 = vmax.f32 %v862, 0.0
    %v904 = vmax.f32 %v865, 0.0
    %v905 = vmax.f32 %v870, 0.0
    %v906 = vmax.f32 %v873, 0.0
    %v907 = vmax.f32 %v878, 0.0
    %s908 = scalar_lea.vmem [#allocation7], 128
    %v909 = vld [vmem:[%s908] sm:$0xf]
    %v910 = vld [vmem:[%s908 + $0x4] sm:$0xf]
    %v911 = vld [vmem:[%s908 + $0x8] sm:$0xf]
    %v912 = vld [vmem:[%s908 + $0xc] sm:$0xf]
    %v913 = vld [vmem:[%s908 + $0x10] sm:$0xf]
    %v914 = vld [vmem:[%s908 + $0x14] sm:$0xf]
    %v915 = vld [vmem:[%s908 + $0x18] sm:$0xf]
    %v916 = vld [vmem:[%s908 + $0x1c] sm:$0xf]
    %v917 = vld [vmem:[%s908 + $0x20] sm:$0xf]
    %v918 = vld [vmem:[%s908 + $0x24] sm:$0xf]
    %v919 = vld [vmem:[%s908 + $0x28] sm:$0xf]
    %v920 = vld [vmem:[%s908 + $0x2c] sm:$0xf]
    %v921 = vld [vmem:[%s908 + $0x30] sm:$0xf]
    %v922 = vld [vmem:[%s908 + $0x34] sm:$0xf]
    %v923 = vld [vmem:[%s908 + $0x38] sm:$0xf]
    %v924 = vld [vmem:[%s908 + $0x3c] sm:$0xf]
    %s925 = scalar_lea.vmem %s4, 2
    %v926 = vld [vmem:[%s925] sm:$0x1]
    %v927 = vpack.c.bf16 %v884, %v883
    %v928 = vpack.c.bf16 %v886, %v885
    %v929 = vpack.c.bf16 %v888, %v887
    %v930 = vpack.c.bf16 %v890, %v889
    %v931 = vpack.c.bf16 %v892, %v891
    %v932 = vpack.c.bf16 %v894, %v893
    %v933 = vpack.c.bf16 %v896, %v895
    %v934 = vpack.c.bf16 %v898, %v897
    %v935 = vpack.c.bf16 %v900, %v899
    %v936 = vpack.c.bf16 %v902, %v901
    %v937 = vpack.c.bf16 %v904, %v903
    %v938 = vpack.c.bf16 %v906, %v905
    %v939 = vpack.c.bf16 %v907, %v907
    %v941 = vlaneseq
    %v942 = vshrl.u32 %v941, 7
    %v943 = vsub.s32 0, %v942
    %v944 = vrot.slane %v926, %v943
    %v962 = vunpack.c.l.b16 %v909
    %v963 = vunpack.c.l.b16 %v910
    %v964 = vunpack.c.l.b16 %v911
    %v965 = vunpack.c.l.b16 %v912
    %v966 = vunpack.c.l.b16 %v913
    %v967 = vunpack.c.l.b16 %v914
    %v968 = vunpack.c.l.b16 %v915
    %v969 = vunpack.c.l.b16 %v916
    %v970 = vunpack.c.l.b16 %v917
    %v971 = vunpack.c.l.b16 %v918
    %v972 = vunpack.c.l.b16 %v919
    %v973 = vunpack.c.l.b16 %v920
    %v974 = vunpack.c.l.b16 %v921
    %v975 = vunpack.c.l.b16 %v922
    %v976 = vunpack.c.l.b16 %v923
    %v977 = vunpack.c.l.b16 %v924
    %v978 = vpack.c.b16 %v963, %v962
    %v979 = vpack.c.b16 %v965, %v964
    %v980 = vpack.c.b16 %v967, %v966
    %v981 = vpack.c.b16 %v969, %v968
    %v982 = vpack.c.b16 %v971, %v970
    %v983 = vpack.c.b16 %v973, %v972
    %v984 = vpack.c.b16 %v975, %v974
    %v985 = vpack.c.b16 %v977, %v976
    %994 = vmatprep.subr.bf16.mxu0 0
    %995 = vmatpush1.bf16.msra.mxu0 %v978
    %996 = vmatprep.subr.bf16.mxu0 0
    %997 = vmatpush1.bf16.msra.mxu0 %v979
    %998 = vmatprep.subr.bf16.mxu0 0
    %999 = vmatpush1.bf16.msra.mxu0 %v980
    %1000 = vmatprep.subr.bf16.mxu0 0
    %1001 = vmatpush1.bf16.msra.mxu0 %v981
    %1002 = vmatprep.subr.bf16.mxu0 0
    %1003 = vmatpush1.bf16.msra.mxu0 %v982
    %1004 = vmatprep.subr.bf16.mxu0 0
    %1005 = vmatpush1.bf16.msra.mxu0 %v983
    %1006 = vmatprep.subr.bf16.mxu0 0
    %1007 = vmatpush1.bf16.msra.mxu0 %v984
    %1008 = vmatprep.subr.bf16.mxu0 0
    %1009 = vmatpush1.bf16.msra.mxu0 %v985
    %1010 = vmatprep.subr.bf16.mxu0 0
    %1011 = vmatpush1.bf16.msra.mxu0 0
    %1012 = vmatprep.subr.bf16.mxu0 0
    %1013 = vmatpush1.bf16.msra.mxu0 0
    %1014 = vmatprep.subr.bf16.mxu0 0
    %1015 = vmatpush1.bf16.msra.mxu0 0
    %1016 = vmatprep.subr.bf16.mxu0 0
    %1017 = vmatpush1.bf16.msra.mxu0 0
    %1018 = vmatprep.subr.bf16.mxu0 0
    %1019 = vmatpush1.bf16.msra.mxu0 0
    %1020 = vmatprep.subr.bf16.mxu0 0
    %1021 = vmatpush1.bf16.msra.mxu0 0
    %1022 = vmatprep.subr.bf16.mxu0 0
    %1023 = vmatpush1.bf16.msra.mxu0 0
    %1024 = vmatprep.subr.bf16.mxu0 0
    %1025 = vmatpush1.bf16.msra.mxu0 0
    %1026 = vmatprep.mubr.bf16.mxu0 0
    %1027 = vmatmul.mubr.bf16.gmra.mrb[0].mxu0 %v927
    %v1028 = vpop.f32.mrb[0].mxu0
    %v1029 = vadd.f32 %v944, %v1028
    %v1030 = vpop.f32.mrb[0].mxu0
    %v1031 = vpop.f32.mrb[0].mxu0
    %v1032 = vadd.f32 %v944, %v1031
    %v1033 = vpop.f32.mrb[0].mxu0
    %1034 = vmatprep.mubr.bf16.mxu0 0
    %1035 = vmatmul.mubr.bf16.gmra.mrb[0].mxu0 %v928
    %v1036 = vpop.f32.mrb[0].mxu0
    %v1037 = vadd.f32 %v944, %v1036
    %v1038 = vpop.f32.mrb[0].mxu0
    %v1039 = vpop.f32.mrb[0].mxu0
    %v1040 = vadd.f32 %v944, %v1039
    %v1041 = vpop.f32.mrb[0].mxu0
    %1042 = vmatprep.mubr.bf16.mxu0 0
    %1043 = vmatmul.mubr.bf16.gmra.mrb[0].mxu0 %v929
    %v1044 = vpop.f32.mrb[0].mxu0
    %v1045 = vadd.f32 %v944, %v1044
    %v1046 = vpop.f32.mrb[0].mxu0
    %v1047 = vpop.f32.mrb[0].mxu0
    %v1048 = vadd.f32 %v944, %v1047
    %v1049 = vpop.f32.mrb[0].mxu0
    %1050 = vmatprep.mubr.bf16.mxu0 0
    %1051 = vmatmul.mubr.bf16.gmra.mrb[0].mxu0 %v930
    %v1052 = vpop.f32.mrb[0].mxu0
    %v1053 = vadd.f32 %v944, %v1052
    %v1054 = vpop.f32.mrb[0].mxu0
    %v1055 = vpop.f32.mrb[0].mxu0
    %v1056 = vadd.f32 %v944, %v1055
    %v1057 = vpop.f32.mrb[0].mxu0
    %1058 = vmatprep.mubr.bf16.mxu0 0
    %1059 = vmatmul.mubr.bf16.gmra.mrb[0].mxu0 %v931
    %v1060 = vpop.f32.mrb[0].mxu0
    %v1061 = vadd.f32 %v944, %v1060
    %v1062 = vpop.f32.mrb[0].mxu0
    %v1063 = vpop.f32.mrb[0].mxu0
    %v1064 = vadd.f32 %v944, %v1063
    %v1065 = vpop.f32.mrb[0].mxu0
    %1066 = vmatprep.mubr.bf16.mxu0 0
    %1067 = vmatmul.mubr.bf16.gmra.mrb[0].mxu0 %v932
    %v1068 = vpop.f32.mrb[0].mxu0
    %v1069 = vadd.f32 %v944, %v1068
    %v1070 = vpop.f32.mrb[0].mxu0
    %v1071 = vpop.f32.mrb[0].mxu0
    %v1072 = vadd.f32 %v944, %v1071
    %v1073 = vpop.f32.mrb[0].mxu0
    %1074 = vmatprep.mubr.bf16.mxu0 0
    %1075 = vmatmul.mubr.bf16.gmra.mrb[0].mxu0 %v933
    %v1076 = vpop.f32.mrb[0].mxu0
    %v1077 = vadd.f32 %v944, %v1076
    %v1078 = vpop.f32.mrb[0].mxu0
    %v1079 = vpop.f32.mrb[0].mxu0
    %v1080 = vadd.f32 %v944, %v1079
    %v1081 = vpop.f32.mrb[0].mxu0
    %1082 = vmatprep.mubr.bf16.mxu0 0
    %1083 = vmatmul.mubr.bf16.gmra.mrb[0].mxu0 %v934
    %v1084 = vpop.f32.mrb[0].mxu0
    %v1085 = vadd.f32 %v944, %v1084
    %v1086 = vpop.f32.mrb[0].mxu0
    %v1087 = vpop.f32.mrb[0].mxu0
    %v1088 = vadd.f32 %v944, %v1087
    %v1089 = vpop.f32.mrb[0].mxu0
    %1090 = vmatprep.mubr.bf16.mxu0 0
    %1091 = vmatmul.mubr.bf16.gmra.mrb[0].mxu0 %v935
    %v1092 = vpop.f32.mrb[0].mxu0
    %v1093 = vadd.f32 %v944, %v1092
    %v1094 = vpop.f32.mrb[0].mxu0
    %v1095 = vpop.f32.mrb[0].mxu0
    %v1096 = vadd.f32 %v944, %v1095
    %v1097 = vpop.f32.mrb[0].mxu0
    %1098 = vmatprep.mubr.bf16.mxu0 0
    %1099 = vmatmul.mubr.bf16.gmra.mrb[0].mxu0 %v936
    %v1100 = vpop.f32.mrb[0].mxu0
    %v1101 = vadd.f32 %v944, %v1100
    %v1102 = vpop.f32.mrb[0].mxu0
    %v1103 = vpop.f32.mrb[0].mxu0
    %v1104 = vadd.f32 %v944, %v1103
    %v1105 = vpop.f32.mrb[0].mxu0
    %1106 = vmatprep.mubr.bf16.mxu0 0
    %1107 = vmatmul.mubr.bf16.gmra.mrb[0].mxu0 %v937
    %v1108 = vpop.f32.mrb[0].mxu0
    %v1109 = vadd.f32 %v944, %v1108
    %v1110 = vpop.f32.mrb[0].mxu0
    %v1111 = vpop.f32.mrb[0].mxu0
    %v1112 = vadd.f32 %v944, %v1111
    %v1113 = vpop.f32.mrb[0].mxu0
    %1114 = vmatprep.mubr.bf16.mxu0 0
    %1115 = vmatmul.mubr.bf16.gmra.mrb[0].mxu0 %v938
    %v1116 = vpop.f32.mrb[0].mxu0
    %v1117 = vadd.f32 %v944, %v1116
    %v1118 = vpop.f32.mrb[0].mxu0
    %v1119 = vpop.f32.mrb[0].mxu0
    %v1120 = vadd.f32 %v944, %v1119
    %v1121 = vpop.f32.mrb[0].mxu0
    %1122 = vmatprep.mubr.bf16.mxu0 0
    %1123 = vmatmul.mubr.bf16.gmra.mrb[0].mxu0 %v939
    %v1124 = vpop.f32.mrb[0].mxu0
    %v1125 = vadd.f32 %v944, %v1124
    %v1126 = vpop.f32.mrb[0].mxu0
    %v1127 = vpop.f32.mrb[0].mxu0
    %v1128 = vpop.f32.mrb[0].mxu0
    %1129 = vdwg.mxu0
    %s1130 = scalar_lea.vmem [#allocation7], 192
    %v1131 = vld [vmem:[%s1130] sm:$0xf]
    %v1132 = vld [vmem:[%s1130 + $0x4] sm:$0xf]
    %v1133 = vld [vmem:[%s1130 + $0x8] sm:$0xf]
    %v1134 = vld [vmem:[%s1130 + $0xc] sm:$0xf]
    %v1135 = vld [vmem:[%s1130 + $0x10] sm:$0xf]
    %v1136 = vld [vmem:[%s1130 + $0x14] sm:$0xf]
    %v1137 = vld [vmem:[%s1130 + $0x18] sm:$0xf]
    %v1138 = vld [vmem:[%s1130 + $0x1c] sm:$0xf]
    %v1139 = vld [vmem:[%s1130 + $0x20] sm:$0xf]
    %v1140 = vld [vmem:[%s1130 + $0x24] sm:$0xf]
    %v1141 = vld [vmem:[%s1130 + $0x28] sm:$0xf]
    %v1142 = vld [vmem:[%s1130 + $0x2c] sm:$0xf]
    %v1143 = vld [vmem:[%s1130 + $0x30] sm:$0xf]
    %v1144 = vld [vmem:[%s1130 + $0x34] sm:$0xf]
    %v1145 = vld [vmem:[%s1130 + $0x38] sm:$0xf]
    %v1146 = vld [vmem:[%s1130 + $0x3c] sm:$0xf]
    %s1147 = scalar_lea.vmem %s4, 3
    %v1148 = vld [vmem:[%s1147] sm:$0x1]
    %v1149 = vpack.c.bf16 %v1032, %v1029
    %v1150 = vpack.c.bf16 %v1040, %v1037
    %v1151 = vpack.c.bf16 %v1048, %v1045
    %v1152 = vpack.c.bf16 %v1056, %v1053
    %v1153 = vpack.c.bf16 %v1064, %v1061
    %v1154 = vpack.c.bf16 %v1072, %v1069
    %v1155 = vpack.c.bf16 %v1080, %v1077
    %v1156 = vpack.c.bf16 %v1088, %v1085
    %v1157 = vpack.c.bf16 %v1096, %v1093
    %v1158 = vpack.c.bf16 %v1104, %v1101
    %v1159 = vpack.c.bf16 %v1112, %v1109
    %v1160 = vpack.c.bf16 %v1120, %v1117
    %v1161 = vpack.c.bf16 %v1125, %v1125
    %v1163 = vlaneseq
    %v1164 = vshrl.u32 %v1163, 7
    %v1165 = vsub.s32 0, %v1164
    %v1166 = vrot.slane %v1148, %v1165
    %v1184 = vunpack.c.l.b16 %v1131
    %v1185 = vunpack.c.l.b16 %v1132
    %v1186 = vunpack.c.l.b16 %v1133
    %v1187 = vunpack.c.l.b16 %v1134
    %v1188 = vunpack.c.l.b16 %v1135
    %v1189 = vunpack.c.l.b16 %v1136
    %v1190 = vunpack.c.l.b16 %v1137
    %v1191 = vunpack.c.l.b16 %v1138
    %v1192 = vunpack.c.l.b16 %v1139
    %v1193 = vunpack.c.l.b16 %v1140
    %v1194 = vunpack.c.l.b16 %v1141
    %v1195 = vunpack.c.l.b16 %v1142
    %v1196 = vunpack.c.l.b16 %v1143
    %v1197 = vunpack.c.l.b16 %v1144
    %v1198 = vunpack.c.l.b16 %v1145
    %v1199 = vunpack.c.l.b16 %v1146
    %v1200 = vpack.c.b16 %v1185, %v1184
    %v1201 = vpack.c.b16 %v1187, %v1186
    %v1202 = vpack.c.b16 %v1189, %v1188
    %v1203 = vpack.c.b16 %v1191, %v1190
    %v1204 = vpack.c.b16 %v1193, %v1192
    %v1205 = vpack.c.b16 %v1195, %v1194
    %v1206 = vpack.c.b16 %v1197, %v1196
    %v1207 = vpack.c.b16 %v1199, %v1198
    %1216 = vmatprep.subr.bf16.mxu0 0
    %1217 = vmatpush1.bf16.msra.mxu0 %v1200
    %1218 = vmatprep.subr.bf16.mxu0 0
    %1219 = vmatpush1.bf16.msra.mxu0 %v1201
    %1220 = vmatprep.subr.bf16.mxu0 0
    %1221 = vmatpush1.bf16.msra.mxu0 %v1202
    %1222 = vmatprep.subr.bf16.mxu0 0
    %1223 = vmatpush1.bf16.msra.mxu0 %v1203
    %1224 = vmatprep.subr.bf16.mxu0 0
    %1225 = vmatpush1.bf16.msra.mxu0 %v1204
    %1226 = vmatprep.subr.bf16.mxu0 0
    %1227 = vmatpush1.bf16.msra.mxu0 %v1205
    %1228 = vmatprep.subr.bf16.mxu0 0
    %1229 = vmatpush1.bf16.msra.mxu0 %v1206
    %1230 = vmatprep.subr.bf16.mxu0 0
    %1231 = vmatpush1.bf16.msra.mxu0 %v1207
    %1232 = vmatprep.subr.bf16.mxu0 0
    %1233 = vmatpush1.bf16.msra.mxu0 0
    %1234 = vmatprep.subr.bf16.mxu0 0
    %1235 = vmatpush1.bf16.msra.mxu0 0
    %1236 = vmatprep.subr.bf16.mxu0 0
    %1237 = vmatpush1.bf16.msra.mxu0 0
    %1238 = vmatprep.subr.bf16.mxu0 0
    %1239 = vmatpush1.bf16.msra.mxu0 0
    %1240 = vmatprep.subr.bf16.mxu0 0
    %1241 = vmatpush1.bf16.msra.mxu0 0
    %1242 = vmatprep.subr.bf16.mxu0 0
    %1243 = vmatpush1.bf16.msra.mxu0 0
    %1244 = vmatprep.subr.bf16.mxu0 0
    %1245 = vmatpush1.bf16.msra.mxu0 0
    %1246 = vmatprep.subr.bf16.mxu0 0
    %1247 = vmatpush1.bf16.msra.mxu0 0
    %1248 = vmatprep.mubr.bf16.mxu0 0
    %1249 = vmatmul.mubr.bf16.gmra.mrb[0].mxu0 %v1149
    %v1250 = vpop.f32.mrb[0].mxu0
    %v1251 = vadd.f32 %v1166, %v1250
    %v1252 = vpop.f32.mrb[0].mxu0
    %v1253 = vpop.f32.mrb[0].mxu0
    %v1254 = vadd.f32 %v1166, %v1253
    %v1255 = vpop.f32.mrb[0].mxu0
    %1256 = vmatprep.mubr.bf16.mxu0 0
    %1257 = vmatmul.mubr.bf16.gmra.mrb[0].mxu0 %v1150
    %v1258 = vpop.f32.mrb[0].mxu0
    %v1259 = vadd.f32 %v1166, %v1258
    %v1260 = vpop.f32.mrb[0].mxu0
    %v1261 = vpop.f32.mrb[0].mxu0
    %v1262 = vadd.f32 %v1166, %v1261
    %v1263 = vpop.f32.mrb[0].mxu0
    %1264 = vmatprep.mubr.bf16.mxu0 0
    %1265 = vmatmul.mubr.bf16.gmra.mrb[0].mxu0 %v1151
    %v1266 = vpop.f32.mrb[0].mxu0
    %v1267 = vadd.f32 %v1166, %v1266
    %v1268 = vpop.f32.mrb[0].mxu0
    %v1269 = vpop.f32.mrb[0].mxu0
    %v1270 = vadd.f32 %v1166, %v1269
    %v1271 = vpop.f32.mrb[0].mxu0
    %1272 = vmatprep.mubr.bf16.mxu0 0
    %1273 = vmatmul.mubr.bf16.gmra.mrb[0].mxu0 %v1152
    %v1274 = vpop.f32.mrb[0].mxu0
    %v1275 = vadd.f32 %v1166, %v1274
    %v1276 = vpop.f32.mrb[0].mxu0
    %v1277 = vpop.f32.mrb[0].mxu0
    %v1278 = vadd.f32 %v1166, %v1277
    %v1279 = vpop.f32.mrb[0].mxu0
    %1280 = vmatprep.mubr.bf16.mxu0 0
    %1281 = vmatmul.mubr.bf16.gmra.mrb[0].mxu0 %v1153
    %v1282 = vpop.f32.mrb[0].mxu0
    %v1283 = vadd.f32 %v1166, %v1282
    %v1284 = vpop.f32.mrb[0].mxu0
    %v1285 = vpop.f32.mrb[0].mxu0
    %v1286 = vadd.f32 %v1166, %v1285
    %v1287 = vpop.f32.mrb[0].mxu0
    %1288 = vmatprep.mubr.bf16.mxu0 0
    %1289 = vmatmul.mubr.bf16.gmra.mrb[0].mxu0 %v1154
    %v1290 = vpop.f32.mrb[0].mxu0
    %v1291 = vadd.f32 %v1166, %v1290
    %v1292 = vpop.f32.mrb[0].mxu0
    %v1293 = vpop.f32.mrb[0].mxu0
    %v1294 = vadd.f32 %v1166, %v1293
    %v1295 = vpop.f32.mrb[0].mxu0
    %1296 = vmatprep.mubr.bf16.mxu0 0
    %1297 = vmatmul.mubr.bf16.gmra.mrb[0].mxu0 %v1155
    %v1298 = vpop.f32.mrb[0].mxu0
    %v1299 = vadd.f32 %v1166, %v1298
    %v1300 = vpop.f32.mrb[0].mxu0
    %v1301 = vpop.f32.mrb[0].mxu0
    %v1302 = vadd.f32 %v1166, %v1301
    %v1303 = vpop.f32.mrb[0].mxu0
    %1304 = vmatprep.mubr.bf16.mxu0 0
    %1305 = vmatmul.mubr.bf16.gmra.mrb[0].mxu0 %v1156
    %v1306 = vpop.f32.mrb[0].mxu0
    %v1307 = vadd.f32 %v1166, %v1306
    %v1308 = vpop.f32.mrb[0].mxu0
    %v1309 = vpop.f32.mrb[0].mxu0
    %v1310 = vadd.f32 %v1166, %v1309
    %v1311 = vpop.f32.mrb[0].mxu0
    %1312 = vmatprep.mubr.bf16.mxu0 0
    %1313 = vmatmul.mubr.bf16.gmra.mrb[0].mxu0 %v1157
    %v1314 = vpop.f32.mrb[0].mxu0
    %v1315 = vadd.f32 %v1166, %v1314
    %v1316 = vpop.f32.mrb[0].mxu0
    %v1317 = vpop.f32.mrb[0].mxu0
    %v1318 = vadd.f32 %v1166, %v1317
    %v1319 = vpop.f32.mrb[0].mxu0
    %1320 = vmatprep.mubr.bf16.mxu0 0
    %1321 = vmatmul.mubr.bf16.gmra.mrb[0].mxu0 %v1158
    %v1322 = vpop.f32.mrb[0].mxu0
    %v1323 = vadd.f32 %v1166, %v1322
    %v1324 = vpop.f32.mrb[0].mxu0
    %v1325 = vpop.f32.mrb[0].mxu0
    %v1326 = vadd.f32 %v1166, %v1325
    %v1327 = vpop.f32.mrb[0].mxu0
    %1328 = vmatprep.mubr.bf16.mxu0 0
    %1329 = vmatmul.mubr.bf16.gmra.mrb[0].mxu0 %v1159
    %v1330 = vpop.f32.mrb[0].mxu0
    %v1331 = vadd.f32 %v1166, %v1330
    %v1332 = vpop.f32.mrb[0].mxu0
    %v1333 = vpop.f32.mrb[0].mxu0
    %v1334 = vadd.f32 %v1166, %v1333
    %v1335 = vpop.f32.mrb[0].mxu0
    %1336 = vmatprep.mubr.bf16.mxu0 0
    %1337 = vmatmul.mubr.bf16.gmra.mrb[0].mxu0 %v1160
    %v1338 = vpop.f32.mrb[0].mxu0
    %v1339 = vadd.f32 %v1166, %v1338
    %v1340 = vpop.f32.mrb[0].mxu0
    %v1341 = vpop.f32.mrb[0].mxu0
    %v1342 = vadd.f32 %v1166, %v1341
    %v1343 = vpop.f32.mrb[0].mxu0
    %1344 = vmatprep.mubr.bf16.mxu0 0
    %1345 = vmatmul.mubr.bf16.gmra.mrb[0].mxu0 %v1161
    %v1346 = vpop.f32.mrb[0].mxu0
    %v1347 = vadd.f32 %v1166, %v1346
    %v1348 = vpop.f32.mrb[0].mxu0
    %v1349 = vpop.f32.mrb[0].mxu0
    %v1350 = vpop.f32.mrb[0].mxu0
    %1351 = vdwg.mxu0
    %v1352 = vmax.f32 %v1251, 0.0
    %v1353 = vmax.f32 %v1254, 0.0
    %v1354 = vmax.f32 %v1259, 0.0
    %v1355 = vmax.f32 %v1262, 0.0
    %v1356 = vmax.f32 %v1267, 0.0
    %v1357 = vmax.f32 %v1270, 0.0
    %v1358 = vmax.f32 %v1275, 0.0
    %v1359 = vmax.f32 %v1278, 0.0
    %v1360 = vmax.f32 %v1283, 0.0
    %v1361 = vmax.f32 %v1286, 0.0
    %v1362 = vmax.f32 %v1291, 0.0
    %v1363 = vmax.f32 %v1294, 0.0
    %v1364 = vmax.f32 %v1299, 0.0
    %v1365 = vmax.f32 %v1302, 0.0
    %v1366 = vmax.f32 %v1307, 0.0
    %v1367 = vmax.f32 %v1310, 0.0
    %v1368 = vmax.f32 %v1315, 0.0
    %v1369 = vmax.f32 %v1318, 0.0
    %v1370 = vmax.f32 %v1323, 0.0
    %v1371 = vmax.f32 %v1326, 0.0
    %v1372 = vmax.f32 %v1331, 0.0
    %v1373 = vmax.f32 %v1334, 0.0
    %v1374 = vmax.f32 %v1339, 0.0
    %v1375 = vmax.f32 %v1342, 0.0
    %v1376 = vmax.f32 %v1347, 0.0
    %s1377 = scalar_lea.vmem [#allocation7], 256
    %v1378 = vld [vmem:[%s1377] sm:$0xf]
    %v1379 = vld [vmem:[%s1377 + $0x4] sm:$0xf]
    %v1380 = vld [vmem:[%s1377 + $0x8] sm:$0xf]
    %v1381 = vld [vmem:[%s1377 + $0xc] sm:$0xf]
    %v1382 = vld [vmem:[%s1377 + $0x10] sm:$0xf]
    %v1383 = vld [vmem:[%s1377 + $0x14] sm:$0xf]
    %v1384 = vld [vmem:[%s1377 + $0x18] sm:$0xf]
    %v1385 = vld [vmem:[%s1377 + $0x1c] sm:$0xf]
    %v1386 = vld [vmem:[%s1377 + $0x20] sm:$0xf]
    %v1387 = vld [vmem:[%s1377 + $0x24] sm:$0xf]
    %v1388 = vld [vmem:[%s1377 + $0x28] sm:$0xf]
    %v1389 = vld [vmem:[%s1377 + $0x2c] sm:$0xf]
    %v1390 = vld [vmem:[%s1377 + $0x30] sm:$0xf]
    %v1391 = vld [vmem:[%s1377 + $0x34] sm:$0xf]
    %v1392 = vld [vmem:[%s1377 + $0x38] sm:$0xf]
    %v1393 = vld [vmem:[%s1377 + $0x3c] sm:$0xf]
    %s1394 = scalar_lea.vmem %s4, 4
    %v1395 = vld [vmem:[%s1394] sm:$0x1]
    %v1396 = vpack.c.bf16 %v1353, %v1352
    %v1397 = vpack.c.bf16 %v1355, %v1354
    %v1398 = vpack.c.bf16 %v1357, %v1356
    %v1399 = vpack.c.bf16 %v1359, %v1358
    %v1400 = vpack.c.bf16 %v1361, %v1360
    %v1401 = vpack.c.bf16 %v1363, %v1362
    %v1402 = vpack.c.bf16 %v1365, %v1364
    %v1403 = vpack.c.bf16 %v1367, %v1366
    %v1404 = vpack.c.bf16 %v1369, %v1368
    %v1405 = vpack.c.bf16 %v1371, %v1370
    %v1406 = vpack.c.bf16 %v1373, %v1372
    %v1407 = vpack.c.bf16 %v1375, %v1374
    %v1408 = vpack.c.bf16 %v1376, %v1376
    %v1410 = vlaneseq
    %v1411 = vshrl.u32 %v1410, 7
    %v1412 = vsub.s32 0, %v1411
    %v1413 = vrot.slane %v1395, %v1412
    %v1431 = vunpack.c.l.b16 %v1378
    %v1432 = vunpack.c.l.b16 %v1379
    %v1433 = vunpack.c.l.b16 %v1380
    %v1434 = vunpack.c.l.b16 %v1381
    %v1435 = vunpack.c.l.b16 %v1382
    %v1436 = vunpack.c.l.b16 %v1383
    %v1437 = vunpack.c.l.b16 %v1384
    %v1438 = vunpack.c.l.b16 %v1385
    %v1439 = vunpack.c.l.b16 %v1386
    %v1440 = vunpack.c.l.b16 %v1387
    %v1441 = vunpack.c.l.b16 %v1388
    %v1442 = vunpack.c.l.b16 %v1389
    %v1443 = vunpack.c.l.b16 %v1390
    %v1444 = vunpack.c.l.b16 %v1391
    %v1445 = vunpack.c.l.b16 %v1392
    %v1446 = vunpack.c.l.b16 %v1393
    %v1447 = vpack.c.b16 %v1432, %v1431
    %v1448 = vpack.c.b16 %v1434, %v1433
    %v1449 = vpack.c.b16 %v1436, %v1435
    %v1450 = vpack.c.b16 %v1438, %v1437
    %v1451 = vpack.c.b16 %v1440, %v1439
    %v1452 = vpack.c.b16 %v1442, %v1441
    %v1453 = vpack.c.b16 %v1444, %v1443
    %v1454 = vpack.c.b16 %v1446, %v1445
    %1463 = vmatprep.subr.bf16.mxu0 0
    %1464 = vmatpush1.bf16.msra.mxu0 %v1447
    %1465 = vmatprep.subr.bf16.mxu0 0
    %1466 = vmatpush1.bf16.msra.mxu0 %v1448
    %1467 = vmatprep.subr.bf16.mxu0 0
    %1468 = vmatpush1.bf16.msra.mxu0 %v1449
    %1469 = vmatprep.subr.bf16.mxu0 0
    %1470 = vmatpush1.bf16.msra.mxu0 %v1450
    %1471 = vmatprep.subr.bf16.mxu0 0
    %1472 = vmatpush1.bf16.msra.mxu0 %v1451
    %1473 = vmatprep.subr.bf16.mxu0 0
    %1474 = vmatpush1.bf16.msra.mxu0 %v1452
    %1475 = vmatprep.subr.bf16.mxu0 0
    %1476 = vmatpush1.bf16.msra.mxu0 %v1453
    %1477 = vmatprep.subr.bf16.mxu0 0
    %1478 = vmatpush1.bf16.msra.mxu0 %v1454
    %1479 = vmatprep.subr.bf16.mxu0 0
    %1480 = vmatpush1.bf16.msra.mxu0 0
    %1481 = vmatprep.subr.bf16.mxu0 0
    %1482 = vmatpush1.bf16.msra.mxu0 0
    %1483 = vmatprep.subr.bf16.mxu0 0
    %1484 = vmatpush1.bf16.msra.mxu0 0
    %1485 = vmatprep.subr.bf16.mxu0 0
    %1486 = vmatpush1.bf16.msra.mxu0 0
    %1487 = vmatprep.subr.bf16.mxu0 0
    %1488 = vmatpush1.bf16.msra.mxu0 0
    %1489 = vmatprep.subr.bf16.mxu0 0
    %1490 = vmatpush1.bf16.msra.mxu0 0
    %1491 = vmatprep.subr.bf16.mxu0 0
    %1492 = vmatpush1.bf16.msra.mxu0 0
    %1493 = vmatprep.subr.bf16.mxu0 0
    %1494 = vmatpush1.bf16.msra.mxu0 0
    %1495 = vmatprep.mubr.bf16.mxu0 0
    %1496 = vmatmul.mubr.bf16.gmra.mrb[0].mxu0 %v1396
    %v1497 = vpop.f32.mrb[0].mxu0
    %v1498 = vadd.f32 %v1413, %v1497
    %v1499 = vpop.f32.mrb[0].mxu0
    %v1500 = vpop.f32.mrb[0].mxu0
    %v1501 = vadd.f32 %v1413, %v1500
    %v1502 = vpop.f32.mrb[0].mxu0
    %1503 = vmatprep.mubr.bf16.mxu0 0
    %1504 = vmatmul.mubr.bf16.gmra.mrb[0].mxu0 %v1397
    %v1505 = vpop.f32.mrb[0].mxu0
    %v1506 = vadd.f32 %v1413, %v1505
    %v1507 = vpop.f32.mrb[0].mxu0
    %v1508 = vpop.f32.mrb[0].mxu0
    %v1509 = vadd.f32 %v1413, %v1508
    %v1510 = vpop.f32.mrb[0].mxu0
    %1511 = vmatprep.mubr.bf16.mxu0 0
    %1512 = vmatmul.mubr.bf16.gmra.mrb[0].mxu0 %v1398
    %v1513 = vpop.f32.mrb[0].mxu0
    %v1514 = vadd.f32 %v1413, %v1513
    %v1515 = vpop.f32.mrb[0].mxu0
    %v1516 = vpop.f32.mrb[0].mxu0
    %v1517 = vadd.f32 %v1413, %v1516
    %v1518 = vpop.f32.mrb[0].mxu0
    %1519 = vmatprep.mubr.bf16.mxu0 0
    %1520 = vmatmul.mubr.bf16.gmra.mrb[0].mxu0 %v1399
    %v1521 = vpop.f32.mrb[0].mxu0
    %v1522 = vadd.f32 %v1413, %v1521
    %v1523 = vpop.f32.mrb[0].mxu0
    %v1524 = vpop.f32.mrb[0].mxu0
    %v1525 = vadd.f32 %v1413, %v1524
    %v1526 = vpop.f32.mrb[0].mxu0
    %1527 = vmatprep.mubr.bf16.mxu0 0
    %1528 = vmatmul.mubr.bf16.gmra.mrb[0].mxu0 %v1400
    %v1529 = vpop.f32.mrb[0].mxu0
    %v1530 = vadd.f32 %v1413, %v1529
    %v1531 = vpop.f32.mrb[0].mxu0
    %v1532 = vpop.f32.mrb[0].mxu0
    %v1533 = vadd.f32 %v1413, %v1532
    %v1534 = vpop.f32.mrb[0].mxu0
    %1535 = vmatprep.mubr.bf16.mxu0 0
    %1536 = vmatmul.mubr.bf16.gmra.mrb[0].mxu0 %v1401
    %v1537 = vpop.f32.mrb[0].mxu0
    %v1538 = vadd.f32 %v1413, %v1537
    %v1539 = vpop.f32.mrb[0].mxu0
    %v1540 = vpop.f32.mrb[0].mxu0
    %v1541 = vadd.f32 %v1413, %v1540
    %v1542 = vpop.f32.mrb[0].mxu0
    %1543 = vmatprep.mubr.bf16.mxu0 0
    %1544 = vmatmul.mubr.bf16.gmra.mrb[0].mxu0 %v1402
    %v1545 = vpop.f32.mrb[0].mxu0
    %v1546 = vadd.f32 %v1413, %v1545
    %v1547 = vpop.f32.mrb[0].mxu0
    %v1548 = vpop.f32.mrb[0].mxu0
    %v1549 = vadd.f32 %v1413, %v1548
    %v1550 = vpop.f32.mrb[0].mxu0
    %1551 = vmatprep.mubr.bf16.mxu0 0
    %1552 = vmatmul.mubr.bf16.gmra.mrb[0].mxu0 %v1403
    %v1553 = vpop.f32.mrb[0].mxu0
    %v1554 = vadd.f32 %v1413, %v1553
    %v1555 = vpop.f32.mrb[0].mxu0
    %v1556 = vpop.f32.mrb[0].mxu0
    %v1557 = vadd.f32 %v1413, %v1556
    %v1558 = vpop.f32.mrb[0].mxu0
    %1559 = vmatprep.mubr.bf16.mxu0 0
    %1560 = vmatmul.mubr.bf16.gmra.mrb[0].mxu0 %v1404
    %v1561 = vpop.f32.mrb[0].mxu0
    %v1562 = vadd.f32 %v1413, %v1561
    %v1563 = vpop.f32.mrb[0].mxu0
    %v1564 = vpop.f32.mrb[0].mxu0
    %v1565 = vadd.f32 %v1413, %v1564
    %v1566 = vpop.f32.mrb[0].mxu0
    %1567 = vmatprep.mubr.bf16.mxu0 0
    %1568 = vmatmul.mubr.bf16.gmra.mrb[0].mxu0 %v1405
    %v1569 = vpop.f32.mrb[0].mxu0
    %v1570 = vadd.f32 %v1413, %v1569
    %v1571 = vpop.f32.mrb[0].mxu0
    %v1572 = vpop.f32.mrb[0].mxu0
    %v1573 = vadd.f32 %v1413, %v1572
    %v1574 = vpop.f32.mrb[0].mxu0
    %1575 = vmatprep.mubr.bf16.mxu0 0
    %1576 = vmatmul.mubr.bf16.gmra.mrb[0].mxu0 %v1406
    %v1577 = vpop.f32.mrb[0].mxu0
    %v1578 = vadd.f32 %v1413, %v1577
    %v1579 = vpop.f32.mrb[0].mxu0
    %v1580 = vpop.f32.mrb[0].mxu0
    %v1581 = vadd.f32 %v1413, %v1580
    %v1582 = vpop.f32.mrb[0].mxu0
    %1583 = vmatprep.mubr.bf16.mxu0 0
    %1584 = vmatmul.mubr.bf16.gmra.mrb[0].mxu0 %v1407
    %v1585 = vpop.f32.mrb[0].mxu0
    %v1586 = vadd.f32 %v1413, %v1585
    %v1587 = vpop.f32.mrb[0].mxu0
    %v1588 = vpop.f32.mrb[0].mxu0
    %v1589 = vadd.f32 %v1413, %v1588
    %v1590 = vpop.f32.mrb[0].mxu0
    %1591 = vmatprep.mubr.bf16.mxu0 0
    %1592 = vmatmul.mubr.bf16.gmra.mrb[0].mxu0 %v1408
    %v1593 = vpop.f32.mrb[0].mxu0
    %v1594 = vadd.f32 %v1413, %v1593
    %v1595 = vpop.f32.mrb[0].mxu0
    %v1596 = vpop.f32.mrb[0].mxu0
    %v1597 = vpop.f32.mrb[0].mxu0
    %1598 = vdwg.mxu0
    %v1599 = vmax.f32 %v1498, 0.0
    %v1600 = vmax.f32 %v1501, 0.0
    %v1601 = vmax.f32 %v1506, 0.0
    %v1602 = vmax.f32 %v1509, 0.0
    %v1603 = vmax.f32 %v1514, 0.0
    %v1604 = vmax.f32 %v1517, 0.0
    %v1605 = vmax.f32 %v1522, 0.0
    %v1606 = vmax.f32 %v1525, 0.0
    %v1607 = vmax.f32 %v1530, 0.0
    %v1608 = vmax.f32 %v1533, 0.0
    %v1609 = vmax.f32 %v1538, 0.0
    %v1610 = vmax.f32 %v1541, 0.0
    %v1611 = vmax.f32 %v1546, 0.0
    %v1612 = vmax.f32 %v1549, 0.0
    %v1613 = vmax.f32 %v1554, 0.0
    %v1614 = vmax.f32 %v1557, 0.0
    %v1615 = vmax.f32 %v1562, 0.0
    %v1616 = vmax.f32 %v1565, 0.0
    %v1617 = vmax.f32 %v1570, 0.0
    %v1618 = vmax.f32 %v1573, 0.0
    %v1619 = vmax.f32 %v1578, 0.0
    %v1620 = vmax.f32 %v1581, 0.0
    %v1621 = vmax.f32 %v1586, 0.0
    %v1622 = vmax.f32 %v1589, 0.0
    %v1623 = vmax.f32 %v1594, 0.0
    %s1624 = scalar_lea.vmem [#allocation7], 320
    %v1625 = vld [vmem:[%s1624] sm:$0xf]
    %v1626 = vld [vmem:[%s1624 + $0x4] sm:$0xf]
    %v1627 = vld [vmem:[%s1624 + $0x8] sm:$0xf]
    %v1628 = vld [vmem:[%s1624 + $0xc] sm:$0xf]
    %v1629 = vld [vmem:[%s1624 + $0x10] sm:$0xf]
    %v1630 = vld [vmem:[%s1624 + $0x14] sm:$0xf]
    %v1631 = vld [vmem:[%s1624 + $0x18] sm:$0xf]
    %v1632 = vld [vmem:[%s1624 + $0x1c] sm:$0xf]
    %v1633 = vld [vmem:[%s1624 + $0x20] sm:$0xf]
    %v1634 = vld [vmem:[%s1624 + $0x24] sm:$0xf]
    %v1635 = vld [vmem:[%s1624 + $0x28] sm:$0xf]
    %v1636 = vld [vmem:[%s1624 + $0x2c] sm:$0xf]
    %v1637 = vld [vmem:[%s1624 + $0x30] sm:$0xf]
    %v1638 = vld [vmem:[%s1624 + $0x34] sm:$0xf]
    %v1639 = vld [vmem:[%s1624 + $0x38] sm:$0xf]
    %v1640 = vld [vmem:[%s1624 + $0x3c] sm:$0xf]
    %s1641 = scalar_lea.vmem %s4, 5
    %v1642 = vld [vmem:[%s1641] sm:$0x1]
    %v1643 = vpack.c.bf16 %v1600, %v1599
    %v1644 = vpack.c.bf16 %v1602, %v1601
    %v1645 = vpack.c.bf16 %v1604, %v1603
    %v1646 = vpack.c.bf16 %v1606, %v1605
    %v1647 = vpack.c.bf16 %v1608, %v1607
    %v1648 = vpack.c.bf16 %v1610, %v1609
    %v1649 = vpack.c.bf16 %v1612, %v1611
    %v1650 = vpack.c.bf16 %v1614, %v1613
    %v1651 = vpack.c.bf16 %v1616, %v1615
    %v1652 = vpack.c.bf16 %v1618, %v1617
    %v1653 = vpack.c.bf16 %v1620, %v1619
    %v1654 = vpack.c.bf16 %v1622, %v1621
    %v1655 = vpack.c.bf16 %v1623, %v1623
    %v1657 = vlaneseq
    %v1658 = vshrl.u32 %v1657, 7
    %v1659 = vsub.s32 0, %v1658
    %v1660 = vrot.slane %v1642, %v1659
    %v1678 = vunpack.c.l.b16 %v1625
    %v1679 = vunpack.c.l.b16 %v1626
    %v1680 = vunpack.c.l.b16 %v1627
    %v1681 = vunpack.c.l.b16 %v1628
    %v1682 = vunpack.c.l.b16 %v1629
    %v1683 = vunpack.c.l.b16 %v1630
    %v1684 = vunpack.c.l.b16 %v1631
    %v1685 = vunpack.c.l.b16 %v1632
    %v1686 = vunpack.c.l.b16 %v1633
    %v1687 = vunpack.c.l.b16 %v1634
    %v1688 = vunpack.c.l.b16 %v1635
    %v1689 = vunpack.c.l.b16 %v1636
    %v1690 = vunpack.c.l.b16 %v1637
    %v1691 = vunpack.c.l.b16 %v1638
    %v1692 = vunpack.c.l.b16 %v1639
    %v1693 = vunpack.c.l.b16 %v1640
    %v1694 = vpack.c.b16 %v1679, %v1678
    %v1695 = vpack.c.b16 %v1681, %v1680
    %v1696 = vpack.c.b16 %v1683, %v1682
    %v1697 = vpack.c.b16 %v1685, %v1684
    %v1698 = vpack.c.b16 %v1687, %v1686
    %v1699 = vpack.c.b16 %v1689, %v1688
    %v1700 = vpack.c.b16 %v1691, %v1690
    %v1701 = vpack.c.b16 %v1693, %v1692
    %1710 = vmatprep.subr.bf16.mxu0 0
    %1711 = vmatpush1.bf16.msra.mxu0 %v1694
    %1712 = vmatprep.subr.bf16.mxu0 0
    %1713 = vmatpush1.bf16.msra.mxu0 %v1695
    %1714 = vmatprep.subr.bf16.mxu0 0
    %1715 = vmatpush1.bf16.msra.mxu0 %v1696
    %1716 = vmatprep.subr.bf16.mxu0 0
    %1717 = vmatpush1.bf16.msra.mxu0 %v1697
    %1718 = vmatprep.subr.bf16.mxu0 0
    %1719 = vmatpush1.bf16.msra.mxu0 %v1698
    %1720 = vmatprep.subr.bf16.mxu0 0
    %1721 = vmatpush1.bf16.msra.mxu0 %v1699
    %1722 = vmatprep.subr.bf16.mxu0 0
    %1723 = vmatpush1.bf16.msra.mxu0 %v1700
    %1724 = vmatprep.subr.bf16.mxu0 0
    %1725 = vmatpush1.bf16.msra.mxu0 %v1701
    %1726 = vmatprep.subr.bf16.mxu0 0
    %1727 = vmatpush1.bf16.msra.mxu0 0
    %1728 = vmatprep.subr.bf16.mxu0 0
    %1729 = vmatpush1.bf16.msra.mxu0 0
    %1730 = vmatprep.subr.bf16.mxu0 0
    %1731 = vmatpush1.bf16.msra.mxu0 0
    %1732 = vmatprep.subr.bf16.mxu0 0
    %1733 = vmatpush1.bf16.msra.mxu0 0
    %1734 = vmatprep.subr.bf16.mxu0 0
    %1735 = vmatpush1.bf16.msra.mxu0 0
    %1736 = vmatprep.subr.bf16.mxu0 0
    %1737 = vmatpush1.bf16.msra.mxu0 0
    %1738 = vmatprep.subr.bf16.mxu0 0
    %1739 = vmatpush1.bf16.msra.mxu0 0
    %1740 = vmatprep.subr.bf16.mxu0 0
    %1741 = vmatpush1.bf16.msra.mxu0 0
    %1742 = vmatprep.mubr.bf16.mxu0 0
    %1743 = vmatmul.mubr.bf16.gmra.mrb[0].mxu0 %v1643
    %v1744 = vpop.f32.mrb[0].mxu0
    %v1745 = vadd.f32 %v1660, %v1744
    %v1746 = vpop.f32.mrb[0].mxu0
    %v1747 = vpop.f32.mrb[0].mxu0
    %v1748 = vadd.f32 %v1660, %v1747
    %v1749 = vpop.f32.mrb[0].mxu0
    %1750 = vmatprep.mubr.bf16.mxu0 0
    %1751 = vmatmul.mubr.bf16.gmra.mrb[0].mxu0 %v1644
    %v1752 = vpop.f32.mrb[0].mxu0
    %v1753 = vadd.f32 %v1660, %v1752
    %v1754 = vpop.f32.mrb[0].mxu0
    %v1755 = vpop.f32.mrb[0].mxu0
    %v1756 = vadd.f32 %v1660, %v1755
    %v1757 = vpop.f32.mrb[0].mxu0
    %1758 = vmatprep.mubr.bf16.mxu0 0
    %1759 = vmatmul.mubr.bf16.gmra.mrb[0].mxu0 %v1645
    %v1760 = vpop.f32.mrb[0].mxu0
    %v1761 = vadd.f32 %v1660, %v1760
    %v1762 = vpop.f32.mrb[0].mxu0
    %v1763 = vpop.f32.mrb[0].mxu0
    %v1764 = vadd.f32 %v1660, %v1763
    %v1765 = vpop.f32.mrb[0].mxu0
    %1766 = vmatprep.mubr.bf16.mxu0 0
    %1767 = vmatmul.mubr.bf16.gmra.mrb[0].mxu0 %v1646
    %v1768 = vpop.f32.mrb[0].mxu0
    %v1769 = vadd.f32 %v1660, %v1768
    %v1770 = vpop.f32.mrb[0].mxu0
    %v1771 = vpop.f32.mrb[0].mxu0
    %v1772 = vadd.f32 %v1660, %v1771
    %v1773 = vpop.f32.mrb[0].mxu0
    %1774 = vmatprep.mubr.bf16.mxu0 0
    %1775 = vmatmul.mubr.bf16.gmra.mrb[0].mxu0 %v1647
    %v1776 = vpop.f32.mrb[0].mxu0
    %v1777 = vadd.f32 %v1660, %v1776
    %v1778 = vpop.f32.mrb[0].mxu0
    %v1779 = vpop.f32.mrb[0].mxu0
    %v1780 = vadd.f32 %v1660, %v1779
    %v1781 = vpop.f32.mrb[0].mxu0
    %1782 = vmatprep.mubr.bf16.mxu0 0
    %1783 = vmatmul.mubr.bf16.gmra.mrb[0].mxu0 %v1648
    %v1784 = vpop.f32.mrb[0].mxu0
    %v1785 = vadd.f32 %v1660, %v1784
    %v1786 = vpop.f32.mrb[0].mxu0
    %v1787 = vpop.f32.mrb[0].mxu0
    %v1788 = vadd.f32 %v1660, %v1787
    %v1789 = vpop.f32.mrb[0].mxu0
    %1790 = vmatprep.mubr.bf16.mxu0 0
    %1791 = vmatmul.mubr.bf16.gmra.mrb[0].mxu0 %v1649
    %v1792 = vpop.f32.mrb[0].mxu0
    %v1793 = vadd.f32 %v1660, %v1792
    %v1794 = vpop.f32.mrb[0].mxu0
    %v1795 = vpop.f32.mrb[0].mxu0
    %v1796 = vadd.f32 %v1660, %v1795
    %v1797 = vpop.f32.mrb[0].mxu0
    %1798 = vmatprep.mubr.bf16.mxu0 0
    %1799 = vmatmul.mubr.bf16.gmra.mrb[0].mxu0 %v1650
    %v1800 = vpop.f32.mrb[0].mxu0
    %v1801 = vadd.f32 %v1660, %v1800
    %v1802 = vpop.f32.mrb[0].mxu0
    %v1803 = vpop.f32.mrb[0].mxu0
    %v1804 = vadd.f32 %v1660, %v1803
    %v1805 = vpop.f32.mrb[0].mxu0
    %1806 = vmatprep.mubr.bf16.mxu0 0
    %1807 = vmatmul.mubr.bf16.gmra.mrb[0].mxu0 %v1651
    %v1808 = vpop.f32.mrb[0].mxu0
    %v1809 = vadd.f32 %v1660, %v1808
    %v1810 = vpop.f32.mrb[0].mxu0
    %v1811 = vpop.f32.mrb[0].mxu0
    %v1812 = vadd.f32 %v1660, %v1811
    %v1813 = vpop.f32.mrb[0].mxu0
    %1814 = vmatprep.mubr.bf16.mxu0 0
    %1815 = vmatmul.mubr.bf16.gmra.mrb[0].mxu0 %v1652
    %v1816 = vpop.f32.mrb[0].mxu0
    %v1817 = vadd.f32 %v1660, %v1816
    %v1818 = vpop.f32.mrb[0].mxu0
    %v1819 = vpop.f32.mrb[0].mxu0
    %v1820 = vadd.f32 %v1660, %v1819
    %v1821 = vpop.f32.mrb[0].mxu0
    %1822 = vmatprep.mubr.bf16.mxu0 0
    %1823 = vmatmul.mubr.bf16.gmra.mrb[0].mxu0 %v1653
    %v1824 = vpop.f32.mrb[0].mxu0
    %v1825 = vadd.f32 %v1660, %v1824
    %v1826 = vpop.f32.mrb[0].mxu0
    %v1827 = vpop.f32.mrb[0].mxu0
    %v1828 = vadd.f32 %v1660, %v1827
    %v1829 = vpop.f32.mrb[0].mxu0
    %1830 = vmatprep.mubr.bf16.mxu0 0
    %1831 = vmatmul.mubr.bf16.gmra.mrb[0].mxu0 %v1654
    %v1832 = vpop.f32.mrb[0].mxu0
    %v1833 = vadd.f32 %v1660, %v1832
    %v1834 = vpop.f32.mrb[0].mxu0
    %v1835 = vpop.f32.mrb[0].mxu0
    %v1836 = vadd.f32 %v1660, %v1835
    %v1837 = vpop.f32.mrb[0].mxu0
    %1838 = vmatprep.mubr.bf16.mxu0 0
    %1839 = vmatmul.mubr.bf16.gmra.mrb[0].mxu0 %v1655
    %v1840 = vpop.f32.mrb[0].mxu0
    %v1841 = vadd.f32 %v1660, %v1840
    %v1842 = vpop.f32.mrb[0].mxu0
    %v1843 = vpop.f32.mrb[0].mxu0
    %v1844 = vpop.f32.mrb[0].mxu0
    %1845 = vdwg.mxu0
    %v1846 = vmax.f32 %v1745, 0.0
    %v1847 = vmax.f32 %v1748, 0.0
    %v1848 = vmax.f32 %v1753, 0.0
    %v1849 = vmax.f32 %v1756, 0.0
    %v1850 = vmax.f32 %v1761, 0.0
    %v1851 = vmax.f32 %v1764, 0.0
    %v1852 = vmax.f32 %v1769, 0.0
    %v1853 = vmax.f32 %v1772, 0.0
    %v1854 = vmax.f32 %v1777, 0.0
    %v1855 = vmax.f32 %v1780, 0.0
    %v1856 = vmax.f32 %v1785, 0.0
    %v1857 = vmax.f32 %v1788, 0.0
    %v1858 = vmax.f32 %v1793, 0.0
    %v1859 = vmax.f32 %v1796, 0.0
    %v1860 = vmax.f32 %v1801, 0.0
    %v1861 = vmax.f32 %v1804, 0.0
    %v1862 = vmax.f32 %v1809, 0.0
    %v1863 = vmax.f32 %v1812, 0.0
    %v1864 = vmax.f32 %v1817, 0.0
    %v1865 = vmax.f32 %v1820, 0.0
    %v1866 = vmax.f32 %v1825, 0.0
    %v1867 = vmax.f32 %v1828, 0.0
    %v1868 = vmax.f32 %v1833, 0.0
    %v1869 = vmax.f32 %v1836, 0.0
    %v1870 = vmax.f32 %v1841, 0.0
    %v1871 = vld [vmem:[#allocation8] sm:$0xf]
    %v1872 = vld [vmem:[#allocation8 + $0x4] sm:$0xf]
    %v1873 = vld [vmem:[#allocation8 + $0x8] sm:$0xf]
    %v1874 = vld [vmem:[#allocation8 + $0xc] sm:$0xf]
    %v1875 = vld [vmem:[#allocation8 + $0x10] sm:$0xf]
    %v1876 = vld [vmem:[#allocation8 + $0x14] sm:$0xf]
    %v1877 = vld [vmem:[#allocation8 + $0x18] sm:$0xf]
    %v1878 = vld [vmem:[#allocation8 + $0x1c] sm:$0xf]
    %v1879 = vld [vmem:[#allocation8 + $0x20] sm:$0xf]
    %v1880 = vld [vmem:[#allocation8 + $0x24] sm:$0xf]
    %v1881 = vld [vmem:[#allocation8 + $0x28] sm:$0xf]
    %v1882 = vld [vmem:[#allocation8 + $0x2c] sm:$0xf]
    %v1883 = vld [vmem:[#allocation8 + $0x30] sm:$0xf]
    %v1884 = vld [vmem:[#allocation8 + $0x34] sm:$0xf]
    %v1885 = vld [vmem:[#allocation8 + $0x38] sm:$0xf]
    %v1886 = vld [vmem:[#allocation8 + $0x3c] sm:$0xf]
    %v1887 = vpack.c.bf16 %v1847, %v1846
    %v1888 = vpack.c.bf16 %v1849, %v1848
    %v1889 = vpack.c.bf16 %v1851, %v1850
    %v1890 = vpack.c.bf16 %v1853, %v1852
    %v1891 = vpack.c.bf16 %v1855, %v1854
    %v1892 = vpack.c.bf16 %v1857, %v1856
    %v1893 = vpack.c.bf16 %v1859, %v1858
    %v1894 = vpack.c.bf16 %v1861, %v1860
    %v1895 = vpack.c.bf16 %v1863, %v1862
    %v1896 = vpack.c.bf16 %v1865, %v1864
    %v1897 = vpack.c.bf16 %v1867, %v1866
    %v1898 = vpack.c.bf16 %v1869, %v1868
    %v1899 = vpack.c.bf16 %v1870, %v1870
    %v1900 = vld [vmem:[%s6] sm:$0x1]
    %v1902 = vlaneseq
    %v1903 = vshrl.u32 %v1902, 7
    %v1904 = vsub.s32 0, %v1903
    %v1905 = vrot.slane %v1900, %v1904
    %v1923 = vunpack.c.l.b16 %v1871
    %v1924 = vunpack.c.l.b16 %v1872
    %v1925 = vunpack.c.l.b16 %v1873
    %v1926 = vunpack.c.l.b16 %v1874
    %v1927 = vunpack.c.l.b16 %v1875
    %v1928 = vunpack.c.l.b16 %v1876
    %v1929 = vunpack.c.l.b16 %v1877
    %v1930 = vunpack.c.l.b16 %v1878
    %v1931 = vunpack.c.l.b16 %v1879
    %v1932 = vunpack.c.l.b16 %v1880
    %v1933 = vunpack.c.l.b16 %v1881
    %v1934 = vunpack.c.l.b16 %v1882
    %v1935 = vunpack.c.l.b16 %v1883
    %v1936 = vunpack.c.l.b16 %v1884
    %v1937 = vunpack.c.l.b16 %v1885
    %v1938 = vunpack.c.l.b16 %v1886
    %v1939 = vpack.c.b16 %v1924, %v1923
    %v1940 = vpack.c.b16 %v1926, %v1925
    %v1941 = vpack.c.b16 %v1928, %v1927
    %v1942 = vpack.c.b16 %v1930, %v1929
    %v1943 = vpack.c.b16 %v1932, %v1931
    %v1944 = vpack.c.b16 %v1934, %v1933
    %v1945 = vpack.c.b16 %v1936, %v1935
    %v1946 = vpack.c.b16 %v1938, %v1937
    %1955 = vmatprep.subr.bf16.mxu0 0
    %1956 = vmatpush1.bf16.msra.mxu0 %v1939
    %1957 = vmatprep.subr.bf16.mxu0 0
    %1958 = vmatpush1.bf16.msra.mxu0 %v1940
    %1959 = vmatprep.subr.bf16.mxu0 0
    %1960 = vmatpush1.bf16.msra.mxu0 %v1941
    %1961 = vmatprep.subr.bf16.mxu0 0
    %1962 = vmatpush1.bf16.msra.mxu0 %v1942
    %1963 = vmatprep.subr.bf16.mxu0 0
    %1964 = vmatpush1.bf16.msra.mxu0 %v1943
    %1965 = vmatprep.subr.bf16.mxu0 0
    %1966 = vmatpush1.bf16.msra.mxu0 %v1944
    %1967 = vmatprep.subr.bf16.mxu0 0
    %1968 = vmatpush1.bf16.msra.mxu0 %v1945
    %1969 = vmatprep.subr.bf16.mxu0 0
    %1970 = vmatpush1.bf16.msra.mxu0 %v1946
    %1971 = vmatprep.subr.bf16.mxu0 0
    %1972 = vmatpush1.bf16.msra.mxu0 0
    %1973 = vmatprep.subr.bf16.mxu0 0
    %1974 = vmatpush1.bf16.msra.mxu0 0
    %1975 = vmatprep.subr.bf16.mxu0 0
    %1976 = vmatpush1.bf16.msra.mxu0 0
    %1977 = vmatprep.subr.bf16.mxu0 0
    %1978 = vmatpush1.bf16.msra.mxu0 0
    %1979 = vmatprep.subr.bf16.mxu0 0
    %1980 = vmatpush1.bf16.msra.mxu0 0
    %1981 = vmatprep.subr.bf16.mxu0 0
    %1982 = vmatpush1.bf16.msra.mxu0 0
    %1983 = vmatprep.subr.bf16.mxu0 0
    %1984 = vmatpush1.bf16.msra.mxu0 0
    %1985 = vmatprep.subr.bf16.mxu0 0
    %1986 = vmatpush1.bf16.msra.mxu0 0
    %1987 = vmatprep.mubr.bf16.mxu0 0
    %1988 = vmatmul.mubr.bf16.gmra.mrb[0].mxu0 %v1887
    %v1989 = vpop.f32.mrb[0].mxu0
    %v1990 = vadd.f32 %v1905, %v1989
    %v1991 = vpop.f32.mrb[0].mxu0
    %v1992 = vpop.f32.mrb[0].mxu0
    %v1993 = vadd.f32 %v1905, %v1992
    %v1994 = vpop.f32.mrb[0].mxu0
    %1995 = vmatprep.mubr.bf16.mxu0 0
    %1996 = vmatmul.mubr.bf16.gmra.mrb[0].mxu0 %v1888
    %v1997 = vpop.f32.mrb[0].mxu0
    %v1998 = vadd.f32 %v1905, %v1997
    %v1999 = vpop.f32.mrb[0].mxu0
    %v2000 = vpop.f32.mrb[0].mxu0
    %v2001 = vadd.f32 %v1905, %v2000
    %v2002 = vpop.f32.mrb[0].mxu0
    %2003 = vmatprep.mubr.bf16.mxu0 0
    %2004 = vmatmul.mubr.bf16.gmra.mrb[0].mxu0 %v1889
    %v2005 = vpop.f32.mrb[0].mxu0
    %v2006 = vadd.f32 %v1905, %v2005
    %v2007 = vpop.f32.mrb[0].mxu0
    %v2008 = vpop.f32.mrb[0].mxu0
    %v2009 = vadd.f32 %v1905, %v2008
    %v2010 = vpop.f32.mrb[0].mxu0
    %2011 = vmatprep.mubr.bf16.mxu0 0
    %2012 = vmatmul.mubr.bf16.gmra.mrb[0].mxu0 %v1890
    %v2013 = vpop.f32.mrb[0].mxu0
    %v2014 = vadd.f32 %v1905, %v2013
    %v2015 = vpop.f32.mrb[0].mxu0
    %v2016 = vpop.f32.mrb[0].mxu0
    %v2017 = vadd.f32 %v1905, %v2016
    %v2018 = vpop.f32.mrb[0].mxu0
    %2019 = vmatprep.mubr.bf16.mxu0 0
    %2020 = vmatmul.mubr.bf16.gmra.mrb[0].mxu0 %v1891
    %v2021 = vpop.f32.mrb[0].mxu0
    %v2022 = vadd.f32 %v1905, %v2021
    %v2023 = vpop.f32.mrb[0].mxu0
    %v2024 = vpop.f32.mrb[0].mxu0
    %v2025 = vadd.f32 %v1905, %v2024
    %v2026 = vpop.f32.mrb[0].mxu0
    %2027 = vmatprep.mubr.bf16.mxu0 0
    %2028 = vmatmul.mubr.bf16.gmra.mrb[0].mxu0 %v1892
    %v2029 = vpop.f32.mrb[0].mxu0
    %v2030 = vadd.f32 %v1905, %v2029
    %v2031 = vpop.f32.mrb[0].mxu0
    %v2032 = vpop.f32.mrb[0].mxu0
    %v2033 = vadd.f32 %v1905, %v2032
    %v2034 = vpop.f32.mrb[0].mxu0
    %2035 = vmatprep.mubr.bf16.mxu0 0
    %2036 = vmatmul.mubr.bf16.gmra.mrb[0].mxu0 %v1893
    %v2037 = vpop.f32.mrb[0].mxu0
    %v2038 = vadd.f32 %v1905, %v2037
    %v2039 = vpop.f32.mrb[0].mxu0
    %v2040 = vpop.f32.mrb[0].mxu0
    %v2041 = vadd.f32 %v1905, %v2040
    %v2042 = vpop.f32.mrb[0].mxu0
    %2043 = vmatprep.mubr.bf16.mxu0 0
    %2044 = vmatmul.mubr.bf16.gmra.mrb[0].mxu0 %v1894
    %v2045 = vpop.f32.mrb[0].mxu0
    %v2046 = vadd.f32 %v1905, %v2045
    %v2047 = vpop.f32.mrb[0].mxu0
    %v2048 = vpop.f32.mrb[0].mxu0
    %v2049 = vadd.f32 %v1905, %v2048
    %v2050 = vpop.f32.mrb[0].mxu0
    %2051 = vmatprep.mubr.bf16.mxu0 0
    %2052 = vmatmul.mubr.bf16.gmra.mrb[0].mxu0 %v1895
    %v2053 = vpop.f32.mrb[0].mxu0
    %v2054 = vadd.f32 %v1905, %v2053
    %v2055 = vpop.f32.mrb[0].mxu0
    %v2056 = vpop.f32.mrb[0].mxu0
    %v2057 = vadd.f32 %v1905, %v2056
    %v2058 = vpop.f32.mrb[0].mxu0
    %2059 = vmatprep.mubr.bf16.mxu0 0
    %2060 = vmatmul.mubr.bf16.gmra.mrb[0].mxu0 %v1896
    %v2061 = vpop.f32.mrb[0].mxu0
    %v2062 = vadd.f32 %v1905, %v2061
    %v2063 = vpop.f32.mrb[0].mxu0
    %v2064 = vpop.f32.mrb[0].mxu0
    %v2065 = vadd.f32 %v1905, %v2064
    %v2066 = vpop.f32.mrb[0].mxu0
    %2067 = vmatprep.mubr.bf16.mxu0 0
    %2068 = vmatmul.mubr.bf16.gmra.mrb[0].mxu0 %v1897
    %v2069 = vpop.f32.mrb[0].mxu0
    %v2070 = vadd.f32 %v1905, %v2069
    %v2071 = vpop.f32.mrb[0].mxu0
    %v2072 = vpop.f32.mrb[0].mxu0
    %v2073 = vadd.f32 %v1905, %v2072
    %v2074 = vpop.f32.mrb[0].mxu0
    %2075 = vmatprep.mubr.bf16.mxu0 0
    %2076 = vmatmul.mubr.bf16.gmra.mrb[0].mxu0 %v1898
    %v2077 = vpop.f32.mrb[0].mxu0
    %v2078 = vadd.f32 %v1905, %v2077
    %v2079 = vpop.f32.mrb[0].mxu0
    %v2080 = vpop.f32.mrb[0].mxu0
    %v2081 = vadd.f32 %v1905, %v2080
    %v2082 = vpop.f32.mrb[0].mxu0
    %2083 = vmatprep.mubr.bf16.mxu0 0
    %2084 = vmatmul.mubr.bf16.gmra.mrb[0].mxu0 %v1899
    %v2085 = vpop.f32.mrb[0].mxu0
    %v2086 = vadd.f32 %v1905, %v2085
    %v2087 = vpop.f32.mrb[0].mxu0
    %v2088 = vpop.f32.mrb[0].mxu0
    %v2089 = vpop.f32.mrb[0].mxu0
    %2090 = vdwg.mxu0
    %2091 = vst [vmem:[#allocation10] sm:$0xff] %v1990
    %2092 = vst [vmem:[#allocation10 + $0x8] sm:$0xff] %v1993
    %2093 = vst [vmem:[#allocation10 + $0x10] sm:$0xff] %v1998
    %2094 = vst [vmem:[#allocation10 + $0x18] sm:$0xff] %v2001
    %2095 = vst [vmem:[#allocation10 + $0x20] sm:$0xff] %v2006
    %2096 = vst [vmem:[#allocation10 + $0x28] sm:$0xff] %v2009
    %2097 = vst [vmem:[#allocation10 + $0x30] sm:$0xff] %v2014
    %2098 = vst [vmem:[#allocation10 + $0x38] sm:$0xff] %v2017
    %2099 = vst [vmem:[#allocation10 + $0x40] sm:$0xff] %v2022
    %2100 = vst [vmem:[#allocation10 + $0x48] sm:$0xff] %v2025
    %2101 = vst [vmem:[#allocation10 + $0x50] sm:$0xff] %v2030
    %2102 = vst [vmem:[#allocation10 + $0x58] sm:$0xff] %v2033
    %2103 = vst [vmem:[#allocation10 + $0x60] sm:$0xff] %v2038
    %2104 = vst [vmem:[#allocation10 + $0x68] sm:$0xff] %v2041
    %2105 = vst [vmem:[#allocation10 + $0x70] sm:$0xff] %v2046
    %2106 = vst [vmem:[#allocation10 + $0x78] sm:$0xff] %v2049
    %2107 = vst [vmem:[#allocation10 + $0x80] sm:$0xff] %v2054
    %2108 = vst [vmem:[#allocation10 + $0x88] sm:$0xff] %v2057
    %2109 = vst [vmem:[#allocation10 + $0x90] sm:$0xff] %v2062
    %2110 = vst [vmem:[#allocation10 + $0x98] sm:$0xff] %v2065
    %2111 = vst [vmem:[#allocation10 + $0xa0] sm:$0xff] %v2070
    %2112 = vst [vmem:[#allocation10 + $0xa8] sm:$0xff] %v2073
    %2113 = vst [vmem:[#allocation10 + $0xb0] sm:$0xff] %v2078
    %2114 = vst [vmem:[#allocation10 + $0xb8] sm:$0xff] %v2081
    %2115 = vst [vmem:[#allocation10 + $0xc0] sm:$0xff] %v2086
    // Predicated region
    $region46: #{tpu_custom_call.1} parent=1 // pred_check
      _
    $region47: #{tpu_custom_call.1} parent=1 // pred_check_branch
      %2117 = sbr.rel (0) target = $region49
    $region48: #{tpu_custom_call.1} parent=1 // pred_region
      %s2119 = ssub.s32 3200, 3200
      %2120 = vsyncadd [#allocation4], %s2119
      %s2121 = sshll.u32 [#allocation10], 4
      %s2122 = int_to_ptr.vmem [resolvable:$true] %s2121
      %2127 = dma.vmem_to_hbm [thread:$0]  %s2122, 3200, %s7, [#allocation4], 128, 128, 8
    $region49: #{tpu_custom_call.1} parent=1 // pred_fallthru
      _
    // Predicated region
    $region50: #{tpu_custom_call.1} parent=1 // pred_check
      _
    $region51: #{tpu_custom_call.1} parent=1 // pred_check_branch
      %2129 = sbr.rel (0) target = $region53
    $region52: #{tpu_custom_call.1} parent=1 // pred_region
      %2130 = dma.done [#allocation4], 3200
    $region53: #{tpu_custom_call.1} parent=1 // pred_fallthru
      _
    %2131 = vsyncpa [#allocation3], 1
    %2132 = vsyncpa [#allocation6], 1
    %2133 = vsyncpa [#allocation9], 1
    %2134 = vsyncpa [#allocation4], 1

</llo_original>
